<compile_context>
chip_gen: v7x
topology: tpu7x:2x2x1
jax: 0.10.0
libtpu: 0.0.40
codegen_flags: <defaults>
</compile_context>

<pallas_src>
import functools

import jax
import jax.numpy as jnp
import numpy as np
from jax.experimental import pallas as pl
from jax.experimental.pallas import tpu as pltpu


def _lstm_block_kernel(x_ref, w_ih_ref, w_hh_ref, b_ref, w_fc_ref, b_fc_ref,
                       h0_ref, c0_ref,
                       y_ref, hn_ref, cn_ref,
                       h_scr, c_scr, hs_scr, xp_scr,
                       *, hidden_dim, input_dim, t_block, b_block):
    H, I, Tb, Bb = hidden_dim, input_dim, t_block, b_block
    ti = pl.program_id(1)  # time-block index (innermost grid axis, sequential)

    # Initialize the recurrent state at the first time block of this batch chunk.
    @pl.when(ti == 0)
    def _():
        h_scr[...] = h0_ref[...]
        c_scr[...] = c0_ref[...]

    # ---- Hoisted input projection (off the recurrence critical path) ------------
    # One MXU matmul with Bb*Tb rows instead of Tb tiny per-step matmuls; also
    # removes the per-step lane-axis concatenate of [x_t, h].
    x_flat = x_ref[...].reshape(Bb * Tb, I)                     # rows ordered b*Tb + t
    x_proj = jnp.dot(x_flat, w_ih_ref[...],
                     preferred_element_type=jnp.float32) + b_ref[...]
    xp_scr[...] = x_proj.reshape(Bb, Tb, 4 * H)                 # controlled VMEM spill

    w_hh = w_hh_ref[...]                                        # resident (H, 4H)

    h = h_scr[...]                                              # (Bb, H) f32
    c = c_scr[...]                                              # (Bb, H) f32

    # ---- Sequential recurrence: one small matmul + elementwise per timestep -----
    for tt in range(Tb):  # statically unrolled time block
        gates = xp_scr[:, tt, :] + jnp.dot(h, w_hh,
                                           preferred_element_type=jnp.float32)
        # Gate columns are stored [i, f, o, g]: sigmoid over the first 3H lanes,
        # tanh only over the last H lanes.  (For production H that is a multiple
        # of 128 these slices fall on whole-vreg boundaries.)
        sig = jax.nn.sigmoid(gates[:, :3 * H])
        g_g = jnp.tanh(gates[:, 3 * H:])
        i_g = sig[:, 0 * H:1 * H]
        f_g = sig[:, 1 * H:2 * H]
        o_g = sig[:, 2 * H:3 * H]

        c = f_g * c + i_g * g_g
        h = o_g * jnp.tanh(c)

        hs_scr[tt, :, :] = h        # time-major so FC output rows stay contiguous

    h_scr[...] = h
    c_scr[...] = c

    # ---- Hoisted FC head (no dependency back into the recurrence) ---------------
    hs_flat = hs_scr[...].reshape(Tb * Bb, H)                   # rows ordered t*Bb + b
    y = jnp.dot(hs_flat, w_fc_ref[...],
                preferred_element_type=jnp.float32) + b_fc_ref[...]   # (Tb*Bb, I)

    # Lane-dense (Bb, Tb*I) output slab via static sublane-slice reads and static
    # lane-slice stores (avoids any minor-dim value reshape in the kernel).
    for tt in range(Tb):
        y_ref[:, tt * I:(tt + 1) * I] = y[tt * Bb:(tt + 1) * Bb, :]

    # Emit final hidden/cell state on the last time block.
    @pl.when(ti == pl.num_programs(1) - 1)
    def _():
        hn_ref[...] = h
        cn_ref[...] = c


def _pick_t_block(T, I):
    """Largest tile-legal divisor of T (<=128), preferring lane-dense Tb*I % 128 == 0."""
    max_tb = min(T, 128)
    divisors = [d for d in range(1, max_tb + 1) if T % d == 0]
    legal = [d for d in divisors if d == T or d % 8 == 0]
    if not legal:
        # TODO(synk): pad T (with per-step masking of h_n/c_n) for shapes where no
        # tile-legal divisor exists; falling back keeps correctness for T <= 128.
        legal = divisors
    lane_dense = [d for d in legal if (d * I) % 128 == 0]
    return max(lane_dense) if lane_dense else max(legal)


def _vmem_limit_bytes(Bb, Tb, I, H, w_bytes):
    """Explicit scoped-VMEM budget: blocks are double-buffered by default."""
    f32 = 4
    dbl = 2
    weights = ((I + H) * 4 * H + H * I) * w_bytes * dbl + (4 * H + I) * f32 * dbl
    io = (Bb * Tb * I * (w_bytes + f32) + 4 * Bb * H * f32) * dbl
    scratch = (2 * Bb * H + Tb * Bb * H + Bb * Tb * 4 * H) * f32
    est = weights + io + scratch
    # Never go below the platform defaults (32 MiB v6e/v7x); raise for large H
    # (important on v5e whose default scoped limit is 16 MiB); cap at v7x physical.
    return int(min(max(1.5 * est + (1 << 20), 32 << 20), 64 << 20))


def ligand_lstm_forward(x, params, hidden=None, *, t_block=None, b_block=None):
    """x: (B, T, input_dim), batch_first — same as the PyTorch module.

    Returns (logits, (h_n, c_n)) with logits (B, T, input_dim) and h_n, c_n of
    shape (1, B, hidden_dim), matching nn.LSTM.
    """
    B, T, I = x.shape
    H = params["w_hh"].shape[0]
    assert params["w_ih"].shape == (I, 4 * H), "w_ih must be stored transposed (I, 4H)"

    if t_block is None:
        t_block = _pick_t_block(T, I)
    assert T % t_block == 0, "T must be divisible by t_block"
    n_t = T // t_block

    if b_block is None:
        b_block = B          # set b_block = B // 2 on v7x to use both TensorCores
    assert B % b_block == 0, "B must be divisible by b_block"
    assert b_block == B or b_block % 8 == 0, "b_block must equal B or be a multiple of 8"
    n_b = B // b_block

    if hidden is None:
        h0 = jnp.zeros((B, H), jnp.float32)
        c0 = jnp.zeros((B, H), jnp.float32)
    else:
        h0 = jnp.asarray(hidden[0]).reshape(B, H).astype(jnp.float32)
        c0 = jnp.asarray(hidden[1]).reshape(B, H).astype(jnp.float32)

    compute_dtype = params["w_ih"].dtype
    w_bytes = jnp.dtype(compute_dtype).itemsize

    kernel = functools.partial(
        _lstm_block_kernel, hidden_dim=H, input_dim=I,
        t_block=t_block, b_block=b_block)

    y_blk, h_n, c_n = pl.pallas_call(
        kernel,
        out_shape=(
            jax.ShapeDtypeStruct((B, T * I), jnp.float32),   # lane-dense y slabs
            jax.ShapeDtypeStruct((B, H), jnp.float32),       # h_n
            jax.ShapeDtypeStruct((B, H), jnp.float32),       # c_n
        ),
        grid_spec=pltpu.PrefetchScalarGridSpec(
            num_scalar_prefetch=0,
            # Time axis MUST stay innermost: h/c scratch carries state across it.
            grid=(n_b, n_t),
            in_specs=[
                pl.BlockSpec((b_block, t_block, I), lambda bi, ti: (bi, ti, 0)),  # x
                pl.BlockSpec((I, 4 * H), lambda bi, ti: (0, 0)),                  # W_ih^T
                pl.BlockSpec((H, 4 * H), lambda bi, ti: (0, 0)),                  # W_hh^T
                pl.BlockSpec((1, 4 * H), lambda bi, ti: (0, 0)),                  # b_ih + b_hh
                pl.BlockSpec((H, I), lambda bi, ti: (0, 0)),                      # W_fc^T
                pl.BlockSpec((1, I), lambda bi, ti: (0, 0)),                      # b_fc
                pl.BlockSpec((b_block, H), lambda bi, ti: (bi, 0)),               # h0
                pl.BlockSpec((b_block, H), lambda bi, ti: (bi, 0)),               # c0
            ],
            out_specs=[
                pl.BlockSpec((b_block, t_block * I), lambda bi, ti: (bi, ti)),    # y slab
                pl.BlockSpec((b_block, H), lambda bi, ti: (bi, 0)),               # h_n
                pl.BlockSpec((b_block, H), lambda bi, ti: (bi, 0)),               # c_n
            ],
            scratch_shapes=[
                pltpu.VMEM((b_block, H), jnp.float32),              # h state
                pltpu.VMEM((b_block, H), jnp.float32),              # c state
                pltpu.VMEM((t_block, b_block, H), jnp.float32),     # per-step h (time-major)
                pltpu.VMEM((b_block, t_block, 4 * H), jnp.float32), # hoisted x projection
            ],
        ),
        compiler_params=pltpu.CompilerParams(
            dimension_semantics=("parallel", "arbitrary"),
            vmem_limit_bytes=_vmem_limit_bytes(b_block, t_block, I, H, w_bytes),
        ),
    )(
        x.astype(compute_dtype),
        params["w_ih"], params["w_hh"], params["b"], params["w_fc"], params["b_fc"],
        h0, c0,
    )

    # (B, T*I) -> (B, T, I): contiguous, pure metadata reshape (no HBM pass).
    y = y_blk.reshape(B, T, I)
    return y, (h_n[None], c_n[None])


def init_params(key, input_dim, hidden_dim, dtype=jnp.float32):
    """Synthetic parameters, PyTorch-style uniform(-1/sqrt(H), 1/sqrt(H)).

    Stored pre-transposed with gate columns reordered [i, f, o, g]:
      w_ih = W_ih^T : (I, 4H)     w_hh = W_hh^T : (H, 4H)
      b    = b_ih + b_hh : (1, 4H)
      w_fc = W_fc^T : (H, I)      b_fc : (1, I)
    Use dtype=jnp.bfloat16 for large H on v6e/v7x (f32 accumulation kept in-kernel).
    """
    H, I = hidden_dim, input_dim
    k = 1.0 / np.sqrt(H)
    keys = jax.random.split(key, 6)
    w_ih = jax.random.uniform(keys[0], (4 * H, I), jnp.float32, -k, k)  # PyTorch [i,f,g,o]
    w_hh = jax.random.uniform(keys[1], (4 * H, H), jnp.float32, -k, k)
    b_ih = jax.random.uniform(keys[2], (4 * H,), jnp.float32, -k, k)
    b_hh = jax.random.uniform(keys[3], (4 * H,), jnp.float32, -k, k)
    w_fc = jax.random.uniform(keys[4], (I, H), jnp.float32, -k, k)
    b_fc = jax.random.uniform(keys[5], (I,), jnp.float32, -k, k)

    def reorder(m):  # [i, f, g, o] -> [i, f, o, g] along axis 0
        i, f, g, o = jnp.split(m, 4, axis=0)
        return jnp.concatenate([i, f, o, g], axis=0)

    return {
        "w_ih": reorder(w_ih).T.astype(dtype),                               # (I, 4H)
        "w_hh": reorder(w_hh).T.astype(dtype),                               # (H, 4H)
        "b": reorder((b_ih + b_hh)[:, None]).reshape(1, 4 * H).astype(jnp.float32),
        "w_fc": w_fc.T.astype(dtype),                                        # (H, I)
        "b_fc": b_fc[None, :].astype(jnp.float32),                           # (1, I)
    }


def _reference_forward(x, params, hidden=None):
    """Pure-JAX reference (lax.scan) for correctness checking."""
    B, T, _ = x.shape
    H = params["w_hh"].shape[0]
    w_ih = params["w_ih"].astype(jnp.float32)
    w_hh = params["w_hh"].astype(jnp.float32)
    w_fc = params["w_fc"].astype(jnp.float32)
    b, b_fc = params["b"], params["b_fc"]

    if hidden is None:
        h0 = jnp.zeros((B, H), jnp.float32)
        c0 = jnp.zeros((B, H), jnp.float32)
    else:
        h0 = jnp.asarray(hidden[0]).reshape(B, H).astype(jnp.float32)
        c0 = jnp.asarray(hidden[1]).reshape(B, H).astype(jnp.float32)

    def step(carry, x_t):
        h, c = carry
        gates = x_t @ w_ih + h @ w_hh + b          # gate columns ordered [i, f, o, g]
        i_g = jax.nn.sigmoid(gates[:, 0 * H:1 * H])
        f_g = jax.nn.sigmoid(gates[:, 1 * H:2 * H])
        o_g = jax.nn.sigmoid(gates[:, 2 * H:3 * H])
        g_g = jnp.tanh(gates[:, 3 * H:4 * H])
        c = f_g * c + i_g * g_g
        h = o_g * jnp.tanh(c)
        return (h, c), h @ w_fc + b_fc

    (h_n, c_n), ys = jax.lax.scan(step, (h0, c0), jnp.transpose(x, (1, 0, 2)))
    return jnp.transpose(ys, (1, 0, 2)), (h_n[None], c_n[None])


if __name__ == "__main__":
    B, T, INPUT_DIM, HIDDEN_DIM = 2, 8, 16, 32

    key = jax.random.PRNGKey(0)
    k_x, k_p = jax.random.split(key)
    x = jax.random.normal(k_x, (B, T, INPUT_DIM), jnp.float32)
    params = init_params(k_p, INPUT_DIM, HIDDEN_DIM)

    y, (h_n, c_n) = ligand_lstm_forward(x, params)
    jax.block_until_ready((y, h_n, c_n))

    # Sanity check against a pure-JAX reference.
    y_ref, (h_ref, c_ref) = _reference_forward(x, params)
    np.testing.assert_allclose(np.asarray(y), np.asarray(y_ref), rtol=1e-5, atol=1e-5)
    np.testing.assert_allclose(np.asarray(h_n), np.asarray(h_ref), rtol=1e-5, atol=1e-5)
    np.testing.assert_allclose(np.asarray(c_n), np.asarray(c_ref), rtol=1e-5, atol=1e-5)

    print("KERNEL_OK")
</pallas_src>

<mosaic_0001>
module attributes {stable_mosaic.version = 11 : i64} {
  func.func @_lstm_block_kernel(%arg0: i32, %arg1: i32, %arg2: memref<2x8x16xf32, #tpu.memory_space<vmem>>, %arg3: memref<16x128xf32, #tpu.memory_space<vmem>>, %arg4: memref<32x128xf32, #tpu.memory_space<vmem>>, %arg5: memref<1x128xf32, #tpu.memory_space<vmem>>, %arg6: memref<32x16xf32, #tpu.memory_space<vmem>>, %arg7: memref<1x16xf32, #tpu.memory_space<vmem>>, %arg8: memref<2x32xf32, #tpu.memory_space<vmem>>, %arg9: memref<2x32xf32, #tpu.memory_space<vmem>>, %arg10: memref<2x128xf32, #tpu.memory_space<vmem>>, %arg11: memref<2x32xf32, #tpu.memory_space<vmem>>, %arg12: memref<2x32xf32, #tpu.memory_space<vmem>>, %arg13: memref<2x32xf32, #tpu.memory_space<vmem>>, %arg14: memref<2x32xf32, #tpu.memory_space<vmem>>, %arg15: memref<8x2x32xf32, #tpu.memory_space<vmem>>, %arg16: memref<2x8x128xf32, #tpu.memory_space<vmem>>) attributes {dimension_semantics = [#tpu.dimension_semantics<parallel>, #tpu.dimension_semantics<arbitrary>], iteration_bounds = array<i64: 1, 1>, scalar_prefetch = 0 : i64, scratch_operands = 4 : i64, tpu.core_type = #tpu.core_type<tc>, window_params = [{transform_indices = @transform_0, window_bounds = array<i64: 2, 8, 16>}, {pipeline_mode = #tpu.pipeline_mode<synchronous>, transform_indices = @transform_1, window_bounds = array<i64: 16, 128>}, {pipeline_mode = #tpu.pipeline_mode<synchronous>, transform_indices = @transform_2, window_bounds = array<i64: 32, 128>}, {pipeline_mode = #tpu.pipeline_mode<synchronous>, transform_indices = @transform_3, window_bounds = array<i64: 1, 128>}, {pipeline_mode = #tpu.pipeline_mode<synchronous>, transform_indices = @transform_4, window_bounds = array<i64: 32, 16>}, {pipeline_mode = #tpu.pipeline_mode<synchronous>, transform_indices = @transform_5, window_bounds = array<i64: 1, 16>}, {transform_indices = @transform_6, window_bounds = array<i64: 2, 32>}, {transform_indices = @transform_7, window_bounds = array<i64: 2, 32>}, {transform_indices = @transform_8, window_bounds = array<i64: 2, 128>}, {transform_indices = @transform_9, window_bounds = array<i64: 2, 32>}, {transform_indices = @transform_10, window_bounds = array<i64: 2, 32>}]} {
    %c0_i32 = arith.constant 0 : i32
    %0 = arith.cmpi eq, %arg1, %c0_i32 : i32
    %1 = arith.extui %0 : i1 to i32
    %c0_i32_0 = arith.constant 0 : i32
    %2 = arith.cmpi ne, %1, %c0_i32_0 : i32
    scf.if %2 {
      %c0_96 = arith.constant 0 : index
      %c0_97 = arith.constant 0 : index
      %227 = vector.load %arg8[%c0_96, %c0_97] : memref<2x32xf32, #tpu.memory_space<vmem>>, vector<2x32xf32>
      %c0_98 = arith.constant 0 : index
      %c0_99 = arith.constant 0 : index
      %228 = vector.load %arg13[%c0_98, %c0_99] : memref<2x32xf32, #tpu.memory_space<vmem>>, vector<2x32xf32>
      tpu.vector_store %arg13[%c0_98, %c0_99], %227 {strides = array<i32>} : memref<2x32xf32, #tpu.memory_space<vmem>>, vector<2x32xf32>,
      %c0_100 = arith.constant 0 : index
      %c0_101 = arith.constant 0 : index
      %229 = vector.load %arg9[%c0_100, %c0_101] : memref<2x32xf32, #tpu.memory_space<vmem>>, vector<2x32xf32>
      %c0_102 = arith.constant 0 : index
      %c0_103 = arith.constant 0 : index
      %230 = vector.load %arg14[%c0_102, %c0_103] : memref<2x32xf32, #tpu.memory_space<vmem>>, vector<2x32xf32>
      tpu.vector_store %arg14[%c0_102, %c0_103], %229 {strides = array<i32>} : memref<2x32xf32, #tpu.memory_space<vmem>>, vector<2x32xf32>,
    } else {
    }
    %c0 = arith.constant 0 : index
    %c0_1 = arith.constant 0 : index
    %c0_2 = arith.constant 0 : index
    %3 = vector.load %arg2[%c0, %c0_1, %c0_2] : memref<2x8x16xf32, #tpu.memory_space<vmem>>, vector<2x8x16xf32>
    %4 = vector.shape_cast %3 : vector<2x8x16xf32> to vector<16x16xf32>
    %c0_3 = arith.constant 0 : index
    %c0_4 = arith.constant 0 : index
    %5 = vector.load %arg3[%c0_3, %c0_4] : memref<16x128xf32, #tpu.memory_space<vmem>>, vector<16x128xf32>
    %cst = arith.constant dense<0.000000e+00> : vector<16x128xf32>
    %6 = tpu.matmul %4, %5, %cst {dimension_numbers = #tpu.dot_dimension_numbers<[1], [0], [0], [1], [0, 0, 1, 1], [], []>} : vector<16x16xf32>, vector<16x128xf32>, vector<16x128xf32> -> vector<16x128xf32>
    %c0_5 = arith.constant 0 : index
    %c0_6 = arith.constant 0 : index
    %7 = vector.load %arg5[%c0_5, %c0_6] : memref<1x128xf32, #tpu.memory_space<vmem>>, vector<1x128xf32>
    %8 = vector.broadcast %7 : vector<1x128xf32> to vector<16x128xf32>
    %9 = arith.addf %6, %8 : vector<16x128xf32>
    %10 = vector.shape_cast %9 : vector<16x128xf32> to vector<2x8x128xf32>
    %c0_7 = arith.constant 0 : index
    %c0_8 = arith.constant 0 : index
    %c0_9 = arith.constant 0 : index
    %11 = vector.load %arg16[%c0_7, %c0_8, %c0_9] : memref<2x8x128xf32, #tpu.memory_space<vmem>>, vector<2x8x128xf32>
    tpu.vector_store %arg16[%c0_7, %c0_8, %c0_9], %10 {strides = array<i32>} : memref<2x8x128xf32, #tpu.memory_space<vmem>>, vector<2x8x128xf32>,
    %c0_10 = arith.constant 0 : index
    %c0_11 = arith.constant 0 : index
    %12 = vector.load %arg4[%c0_10, %c0_11] : memref<32x128xf32, #tpu.memory_space<vmem>>, vector<32x128xf32>
    %c0_12 = arith.constant 0 : index
    %c0_13 = arith.constant 0 : index
    %13 = vector.load %arg13[%c0_12, %c0_13] : memref<2x32xf32, #tpu.memory_space<vmem>>, vector<2x32xf32>
    %c0_14 = arith.constant 0 : index
    %c0_15 = arith.constant 0 : index
    %14 = vector.load %arg14[%c0_14, %c0_15] : memref<2x32xf32, #tpu.memory_space<vmem>>, vector<2x32xf32>
    %c0_16 = arith.constant 0 : index
    %c0_17 = arith.constant 0 : index
    %c0_18 = arith.constant 0 : index
    %15 = vector.load %arg16[%c0_16, %c0_17, %c0_18] : memref<2x8x128xf32, #tpu.memory_space<vmem>>, vector<2x1x128xf32>
    %16 = vector.shape_cast %15 : vector<2x1x128xf32> to vector<2x128xf32>
    %cst_19 = arith.constant dense<0.000000e+00> : vector<2x128xf32>
    %17 = tpu.matmul %13, %12, %cst_19 {dimension_numbers = #tpu.dot_dimension_numbers<[1], [0], [0], [1], [0, 0, 1, 1], [], []>} : vector<2x32xf32>, vector<32x128xf32>, vector<2x128xf32> -> vector<2x128xf32>
    %18 = arith.addf %16, %17 : vector<2x128xf32>
    %19 = vector.extract_strided_slice %18 {offsets = [0, 0], sizes = [2, 96], strides = [1, 1]} : vector<2x128xf32> to vector<2x96xf32>
    %20 = arith.negf %19 : vector<2x96xf32>
    %21 = math.exp %20 : vector<2x96xf32>
    %cst_20 = arith.constant 1.000000e+00 : f32
    %22 = vector.broadcast %cst_20 : f32 to vector<2x96xf32>
    %23 = arith.addf %22, %21 : vector<2x96xf32>
    %24 = arith.divf %22, %23 : vector<2x96xf32>
    %25 = vector.extract_strided_slice %18 {offsets = [0, 96], sizes = [2, 32], strides = [1, 1]} : vector<2x128xf32> to vector<2x32xf32>
    %26 = math.tanh %25 : vector<2x32xf32>
    %27 = vector.extract_strided_slice %24 {offsets = [0, 0], sizes = [2, 32], strides = [1, 1]} : vector<2x96xf32> to vector<2x32xf32>
    %28 = vector.extract_strided_slice %24 {offsets = [0, 32], sizes = [2, 32], strides = [1, 1]} : vector<2x96xf32> to vector<2x32xf32>
    %29 = vector.extract_strided_slice %24 {offsets = [0, 64], sizes = [2, 32], strides = [1, 1]} : vector<2x96xf32> to vector<2x32xf32>
    %30 = arith.mulf %28, %14 : vector<2x32xf32>
    %31 = arith.mulf %27, %26 : vector<2x32xf32>
    %32 = arith.addf %30, %31 : vector<2x32xf32>
    %33 = math.tanh %32 : vector<2x32xf32>
    %34 = arith.mulf %29, %33 : vector<2x32xf32>
    %c0_21 = arith.constant 0 : index
    %c0_22 = arith.constant 0 : index
    %c0_23 = arith.constant 0 : index
    %35 = vector.load %arg15[%c0_21, %c0_22, %c0_23] : memref<8x2x32xf32, #tpu.memory_space<vmem>>, vector<1x2x32xf32>
    %36 = vector.shape_cast %35 : vector<1x2x32xf32> to vector<2x32xf32>
    %37 = vector.shape_cast %34 : vector<2x32xf32> to vector<1x2x32xf32>
    tpu.vector_store %arg15[%c0_21, %c0_22, %c0_23], %37 {strides = array<i32>} : memref<8x2x32xf32, #tpu.memory_space<vmem>>, vector<1x2x32xf32>,
    %c0_24 = arith.constant 0 : index
    %c1 = arith.constant 1 : index
    %c0_25 = arith.constant 0 : index
    %38 = vector.load %arg16[%c0_24, %c1, %c0_25] : memref<2x8x128xf32, #tpu.memory_space<vmem>>, vector<2x1x128xf32>
    %39 = vector.shape_cast %38 : vector<2x1x128xf32> to vector<2x128xf32>
    %cst_26 = arith.constant dense<0.000000e+00> : vector<2x128xf32>
    %40 = tpu.matmul %34, %12, %cst_26 {dimension_numbers = #tpu.dot_dimension_numbers<[1], [0], [0], [1], [0, 0, 1, 1], [], []>} : vector<2x32xf32>, vector<32x128xf32>, vector<2x128xf32> -> vector<2x128xf32>
    %41 = arith.addf %39, %40 : vector<2x128xf32>
    %42 = vector.extract_strided_slice %41 {offsets = [0, 0], sizes = [2, 96], strides = [1, 1]} : vector<2x128xf32> to vector<2x96xf32>
    %43 = arith.negf %42 : vector<2x96xf32>
    %44 = math.exp %43 : vector<2x96xf32>
    %cst_27 = arith.constant 1.000000e+00 : f32
    %45 = vector.broadcast %cst_27 : f32 to vector<2x96xf32>
    %46 = arith.addf %45, %44 : vector<2x96xf32>
    %47 = arith.divf %45, %46 : vector<2x96xf32>
    %48 = vector.extract_strided_slice %41 {offsets = [0, 96], sizes = [2, 32], strides = [1, 1]} : vector<2x128xf32> to vector<2x32xf32>
    %49 = math.tanh %48 : vector<2x32xf32>
    %50 = vector.extract_strided_slice %47 {offsets = [0, 0], sizes = [2, 32], strides = [1, 1]} : vector<2x96xf32> to vector<2x32xf32>
    %51 = vector.extract_strided_slice %47 {offsets = [0, 32], sizes = [2, 32], strides = [1, 1]} : vector<2x96xf32> to vector<2x32xf32>
    %52 = vector.extract_strided_slice %47 {offsets = [0, 64], sizes = [2, 32], strides = [1, 1]} : vector<2x96xf32> to vector<2x32xf32>
    %53 = arith.mulf %51, %32 : vector<2x32xf32>
    %54 = arith.mulf %50, %49 : vector<2x32xf32>
    %55 = arith.addf %53, %54 : vector<2x32xf32>
    %56 = math.tanh %55 : vector<2x32xf32>
    %57 = arith.mulf %52, %56 : vector<2x32xf32>
    %c1_28 = arith.constant 1 : index
    %c0_29 = arith.constant 0 : index
    %c0_30 = arith.constant 0 : index
    %58 = vector.load %arg15[%c1_28, %c0_29, %c0_30] : memref<8x2x32xf32, #tpu.memory_space<vmem>>, vector<1x2x32xf32>
    %59 = vector.shape_cast %58 : vector<1x2x32xf32> to vector<2x32xf32>
    %60 = vector.shape_cast %57 : vector<2x32xf32> to vector<1x2x32xf32>
    tpu.vector_store %arg15[%c1_28, %c0_29, %c0_30], %60 {strides = array<i32>} : memref<8x2x32xf32, #tpu.memory_space<vmem>>, vector<1x2x32xf32>,
    %c0_31 = arith.constant 0 : index
    %c2 = arith.constant 2 : index
    %c0_32 = arith.constant 0 : index
    %61 = vector.load %arg16[%c0_31, %c2, %c0_32] : memref<2x8x128xf32, #tpu.memory_space<vmem>>, vector<2x1x128xf32>
    %62 = vector.shape_cast %61 : vector<2x1x128xf32> to vector<2x128xf32>
    %cst_33 = arith.constant dense<0.000000e+00> : vector<2x128xf32>
    %63 = tpu.matmul %57, %12, %cst_33 {dimension_numbers = #tpu.dot_dimension_numbers<[1], [0], [0], [1], [0, 0, 1, 1], [], []>} : vector<2x32xf32>, vector<32x128xf32>, vector<2x128xf32> -> vector<2x128xf32>
    %64 = arith.addf %62, %63 : vector<2x128xf32>
    %65 = vector.extract_strided_slice %64 {offsets = [0, 0], sizes = [2, 96], strides = [1, 1]} : vector<2x128xf32> to vector<2x96xf32>
    %66 = arith.negf %65 : vector<2x96xf32>
    %67 = math.exp %66 : vector<2x96xf32>
    %cst_34 = arith.constant 1.000000e+00 : f32
    %68 = vector.broadcast %cst_34 : f32 to vector<2x96xf32>
    %69 = arith.addf %68, %67 : vector<2x96xf32>
    %70 = arith.divf %68, %69 : vector<2x96xf32>
    %71 = vector.extract_strided_slice %64 {offsets = [0, 96], sizes = [2, 32], strides = [1, 1]} : vector<2x128xf32> to vector<2x32xf32>
    %72 = math.tanh %71 : vector<2x32xf32>
    %73 = vector.extract_strided_slice %70 {offsets = [0, 0], sizes = [2, 32], strides = [1, 1]} : vector<2x96xf32> to vector<2x32xf32>
    %74 = vector.extract_strided_slice %70 {offsets = [0, 32], sizes = [2, 32], strides = [1, 1]} : vector<2x96xf32> to vector<2x32xf32>
    %75 = vector.extract_strided_slice %70 {offsets = [0, 64], sizes = [2, 32], strides = [1, 1]} : vector<2x96xf32> to vector<2x32xf32>
    %76 = arith.mulf %74, %55 : vector<2x32xf32>
    %77 = arith.mulf %73, %72 : vector<2x32xf32>
    %78 = arith.addf %76, %77 : vector<2x32xf32>
    %79 = math.tanh %78 : vector<2x32xf32>
    %80 = arith.mulf %75, %79 : vector<2x32xf32>
    %c2_35 = arith.constant 2 : index
    %c0_36 = arith.constant 0 : index
    %c0_37 = arith.constant 0 : index
    %81 = vector.load %arg15[%c2_35, %c0_36, %c0_37] : memref<8x2x32xf32, #tpu.memory_space<vmem>>, vector<1x2x32xf32>
    %82 = vector.shape_cast %81 : vector<1x2x32xf32> to vector<2x32xf32>
    %83 = vector.shape_cast %80 : vector<2x32xf32> to vector<1x2x32xf32>
    tpu.vector_store %arg15[%c2_35, %c0_36, %c0_37], %83 {strides = array<i32>} : memref<8x2x32xf32, #tpu.memory_space<vmem>>, vector<1x2x32xf32>,
    %c0_38 = arith.constant 0 : index
    %c3 = arith.constant 3 : index
    %c0_39 = arith.constant 0 : index
    %84 = vector.load %arg16[%c0_38, %c3, %c0_39] : memref<2x8x128xf32, #tpu.memory_space<vmem>>, vector<2x1x128xf32>
    %85 = vector.shape_cast %84 : vector<2x1x128xf32> to vector<2x128xf32>
    %cst_40 = arith.constant dense<0.000000e+00> : vector<2x128xf32>
    %86 = tpu.matmul %80, %12, %cst_40 {dimension_numbers = #tpu.dot_dimension_numbers<[1], [0], [0], [1], [0, 0, 1, 1], [], []>} : vector<2x32xf32>, vector<32x128xf32>, vector<2x128xf32> -> vector<2x128xf32>
    %87 = arith.addf %85, %86 : vector<2x128xf32>
    %88 = vector.extract_strided_slice %87 {offsets = [0, 0], sizes = [2, 96], strides = [1, 1]} : vector<2x128xf32> to vector<2x96xf32>
    %89 = arith.negf %88 : vector<2x96xf32>
    %90 = math.exp %89 : vector<2x96xf32>
    %cst_41 = arith.constant 1.000000e+00 : f32
    %91 = vector.broadcast %cst_41 : f32 to vector<2x96xf32>
    %92 = arith.addf %91, %90 : vector<2x96xf32>
    %93 = arith.divf %91, %92 : vector<2x96xf32>
    %94 = vector.extract_strided_slice %87 {offsets = [0, 96], sizes = [2, 32], strides = [1, 1]} : vector<2x128xf32> to vector<2x32xf32>
    %95 = math.tanh %94 : vector<2x32xf32>
    %96 = vector.extract_strided_slice %93 {offsets = [0, 0], sizes = [2, 32], strides = [1, 1]} : vector<2x96xf32> to vector<2x32xf32>
    %97 = vector.extract_strided_slice %93 {offsets = [0, 32], sizes = [2, 32], strides = [1, 1]} : vector<2x96xf32> to vector<2x32xf32>
    %98 = vector.extract_strided_slice %93 {offsets = [0, 64], sizes = [2, 32], strides = [1, 1]} : vector<2x96xf32> to vector<2x32xf32>
    %99 = arith.mulf %97, %78 : vector<2x32xf32>
    %100 = arith.mulf %96, %95 : vector<2x32xf32>
    %101 = arith.addf %99, %100 : vector<2x32xf32>
    %102 = math.tanh %101 : vector<2x32xf32>
    %103 = arith.mulf %98, %102 : vector<2x32xf32>
    %c3_42 = arith.constant 3 : index
    %c0_43 = arith.constant 0 : index
    %c0_44 = arith.constant 0 : index
    %104 = vector.load %arg15[%c3_42, %c0_43, %c0_44] : memref<8x2x32xf32, #tpu.memory_space<vmem>>, vector<1x2x32xf32>
    %105 = vector.shape_cast %104 : vector<1x2x32xf32> to vector<2x32xf32>
    %106 = vector.shape_cast %103 : vector<2x32xf32> to vector<1x2x32xf32>
    tpu.vector_store %arg15[%c3_42, %c0_43, %c0_44], %106 {strides = array<i32>} : memref<8x2x32xf32, #tpu.memory_space<vmem>>, vector<1x2x32xf32>,
    %c0_45 = arith.constant 0 : index
    %c4 = arith.constant 4 : index
    %c0_46 = arith.constant 0 : index
    %107 = vector.load %arg16[%c0_45, %c4, %c0_46] : memref<2x8x128xf32, #tpu.memory_space<vmem>>, vector<2x1x128xf32>
    %108 = vector.shape_cast %107 : vector<2x1x128xf32> to vector<2x128xf32>
    %cst_47 = arith.constant dense<0.000000e+00> : vector<2x128xf32>
    %109 = tpu.matmul %103, %12, %cst_47 {dimension_numbers = #tpu.dot_dimension_numbers<[1], [0], [0], [1], [0, 0, 1, 1], [], []>} : vector<2x32xf32>, vector<32x128xf32>, vector<2x128xf32> -> vector<2x128xf32>
    %110 = arith.addf %108, %109 : vector<2x128xf32>
    %111 = vector.extract_strided_slice %110 {offsets = [0, 0], sizes = [2, 96], strides = [1, 1]} : vector<2x128xf32> to vector<2x96xf32>
    %112 = arith.negf %111 : vector<2x96xf32>
    %113 = math.exp %112 : vector<2x96xf32>
    %cst_48 = arith.constant 1.000000e+00 : f32
    %114 = vector.broadcast %cst_48 : f32 to vector<2x96xf32>
    %115 = arith.addf %114, %113 : vector<2x96xf32>
    %116 = arith.divf %114, %115 : vector<2x96xf32>
    %117 = vector.extract_strided_slice %110 {offsets = [0, 96], sizes = [2, 32], strides = [1, 1]} : vector<2x128xf32> to vector<2x32xf32>
    %118 = math.tanh %117 : vector<2x32xf32>
    %119 = vector.extract_strided_slice %116 {offsets = [0, 0], sizes = [2, 32], strides = [1, 1]} : vector<2x96xf32> to vector<2x32xf32>
    %120 = vector.extract_strided_slice %116 {offsets = [0, 32], sizes = [2, 32], strides = [1, 1]} : vector<2x96xf32> to vector<2x32xf32>
    %121 = vector.extract_strided_slice %116 {offsets = [0, 64], sizes = [2, 32], strides = [1, 1]} : vector<2x96xf32> to vector<2x32xf32>
    %122 = arith.mulf %120, %101 : vector<2x32xf32>
    %123 = arith.mulf %119, %118 : vector<2x32xf32>
    %124 = arith.addf %122, %123 : vector<2x32xf32>
    %125 = math.tanh %124 : vector<2x32xf32>
    %126 = arith.mulf %121, %125 : vector<2x32xf32>
    %c4_49 = arith.constant 4 : index
    %c0_50 = arith.constant 0 : index
    %c0_51 = arith.constant 0 : index
    %127 = vector.load %arg15[%c4_49, %c0_50, %c0_51] : memref<8x2x32xf32, #tpu.memory_space<vmem>>, vector<1x2x32xf32>
    %128 = vector.shape_cast %127 : vector<1x2x32xf32> to vector<2x32xf32>
    %129 = vector.shape_cast %126 : vector<2x32xf32> to vector<1x2x32xf32>
    tpu.vector_store %arg15[%c4_49, %c0_50, %c0_51], %129 {strides = array<i32>} : memref<8x2x32xf32, #tpu.memory_space<vmem>>, vector<1x2x32xf32>,
    %c0_52 = arith.constant 0 : index
    %c5 = arith.constant 5 : index
    %c0_53 = arith.constant 0 : index
    %130 = vector.load %arg16[%c0_52, %c5, %c0_53] : memref<2x8x128xf32, #tpu.memory_space<vmem>>, vector<2x1x128xf32>
    %131 = vector.shape_cast %130 : vector<2x1x128xf32> to vector<2x128xf32>
    %cst_54 = arith.constant dense<0.000000e+00> : vector<2x128xf32>
    %132 = tpu.matmul %126, %12, %cst_54 {dimension_numbers = #tpu.dot_dimension_numbers<[1], [0], [0], [1], [0, 0, 1, 1], [], []>} : vector<2x32xf32>, vector<32x128xf32>, vector<2x128xf32> -> vector<2x128xf32>
    %133 = arith.addf %131, %132 : vector<2x128xf32>
    %134 = vector.extract_strided_slice %133 {offsets = [0, 0], sizes = [2, 96], strides = [1, 1]} : vector<2x128xf32> to vector<2x96xf32>
    %135 = arith.negf %134 : vector<2x96xf32>
    %136 = math.exp %135 : vector<2x96xf32>
    %cst_55 = arith.constant 1.000000e+00 : f32
    %137 = vector.broadcast %cst_55 : f32 to vector<2x96xf32>
    %138 = arith.addf %137, %136 : vector<2x96xf32>
    %139 = arith.divf %137, %138 : vector<2x96xf32>
    %140 = vector.extract_strided_slice %133 {offsets = [0, 96], sizes = [2, 32], strides = [1, 1]} : vector<2x128xf32> to vector<2x32xf32>
    %141 = math.tanh %140 : vector<2x32xf32>
    %142 = vector.extract_strided_slice %139 {offsets = [0, 0], sizes = [2, 32], strides = [1, 1]} : vector<2x96xf32> to vector<2x32xf32>
    %143 = vector.extract_strided_slice %139 {offsets = [0, 32], sizes = [2, 32], strides = [1, 1]} : vector<2x96xf32> to vector<2x32xf32>
    %144 = vector.extract_strided_slice %139 {offsets = [0, 64], sizes = [2, 32], strides = [1, 1]} : vector<2x96xf32> to vector<2x32xf32>
    %145 = arith.mulf %143, %124 : vector<2x32xf32>
    %146 = arith.mulf %142, %141 : vector<2x32xf32>
    %147 = arith.addf %145, %146 : vector<2x32xf32>
    %148 = math.tanh %147 : vector<2x32xf32>
    %149 = arith.mulf %144, %148 : vector<2x32xf32>
    %c5_56 = arith.constant 5 : index
    %c0_57 = arith.constant 0 : index
    %c0_58 = arith.constant 0 : index
    %150 = vector.load %arg15[%c5_56, %c0_57, %c0_58] : memref<8x2x32xf32, #tpu.memory_space<vmem>>, vector<1x2x32xf32>
    %151 = vector.shape_cast %150 : vector<1x2x32xf32> to vector<2x32xf32>
    %152 = vector.shape_cast %149 : vector<2x32xf32> to vector<1x2x32xf32>
    tpu.vector_store %arg15[%c5_56, %c0_57, %c0_58], %152 {strides = array<i32>} : memref<8x2x32xf32, #tpu.memory_space<vmem>>, vector<1x2x32xf32>,
    %c0_59 = arith.constant 0 : index
    %c6 = arith.constant 6 : index
    %c0_60 = arith.constant 0 : index
    %153 = vector.load %arg16[%c0_59, %c6, %c0_60] : memref<2x8x128xf32, #tpu.memory_space<vmem>>, vector<2x1x128xf32>
    %154 = vector.shape_cast %153 : vector<2x1x128xf32> to vector<2x128xf32>
    %cst_61 = arith.constant dense<0.000000e+00> : vector<2x128xf32>
    %155 = tpu.matmul %149, %12, %cst_61 {dimension_numbers = #tpu.dot_dimension_numbers<[1], [0], [0], [1], [0, 0, 1, 1], [], []>} : vector<2x32xf32>, vector<32x128xf32>, vector<2x128xf32> -> vector<2x128xf32>
    %156 = arith.addf %154, %155 : vector<2x128xf32>
    %157 = vector.extract_strided_slice %156 {offsets = [0, 0], sizes = [2, 96], strides = [1, 1]} : vector<2x128xf32> to vector<2x96xf32>
    %158 = arith.negf %157 : vector<2x96xf32>
    %159 = math.exp %158 : vector<2x96xf32>
    %cst_62 = arith.constant 1.000000e+00 : f32
    %160 = vector.broadcast %cst_62 : f32 to vector<2x96xf32>
    %161 = arith.addf %160, %159 : vector<2x96xf32>
    %162 = arith.divf %160, %161 : vector<2x96xf32>
    %163 = vector.extract_strided_slice %156 {offsets = [0, 96], sizes = [2, 32], strides = [1, 1]} : vector<2x128xf32> to vector<2x32xf32>
    %164 = math.tanh %163 : vector<2x32xf32>
    %165 = vector.extract_strided_slice %162 {offsets = [0, 0], sizes = [2, 32], strides = [1, 1]} : vector<2x96xf32> to vector<2x32xf32>
    %166 = vector.extract_strided_slice %162 {offsets = [0, 32], sizes = [2, 32], strides = [1, 1]} : vector<2x96xf32> to vector<2x32xf32>
    %167 = vector.extract_strided_slice %162 {offsets = [0, 64], sizes = [2, 32], strides = [1, 1]} : vector<2x96xf32> to vector<2x32xf32>
    %168 = arith.mulf %166, %147 : vector<2x32xf32>
    %169 = arith.mulf %165, %164 : vector<2x32xf32>
    %170 = arith.addf %168, %169 : vector<2x32xf32>
    %171 = math.tanh %170 : vector<2x32xf32>
    %172 = arith.mulf %167, %171 : vector<2x32xf32>
    %c6_63 = arith.constant 6 : index
    %c0_64 = arith.constant 0 : index
    %c0_65 = arith.constant 0 : index
    %173 = vector.load %arg15[%c6_63, %c0_64, %c0_65] : memref<8x2x32xf32, #tpu.memory_space<vmem>>, vector<1x2x32xf32>
    %174 = vector.shape_cast %173 : vector<1x2x32xf32> to vector<2x32xf32>
    %175 = vector.shape_cast %172 : vector<2x32xf32> to vector<1x2x32xf32>
    tpu.vector_store %arg15[%c6_63, %c0_64, %c0_65], %175 {strides = array<i32>} : memref<8x2x32xf32, #tpu.memory_space<vmem>>, vector<1x2x32xf32>,
    %c0_66 = arith.constant 0 : index
    %c7 = arith.constant 7 : index
    %c0_67 = arith.constant 0 : index
    %176 = vector.load %arg16[%c0_66, %c7, %c0_67] : memref<2x8x128xf32, #tpu.memory_space<vmem>>, vector<2x1x128xf32>
    %177 = vector.shape_cast %176 : vector<2x1x128xf32> to vector<2x128xf32>
    %cst_68 = arith.constant dense<0.000000e+00> : vector<2x128xf32>
    %178 = tpu.matmul %172, %12, %cst_68 {dimension_numbers = #tpu.dot_dimension_numbers<[1], [0], [0], [1], [0, 0, 1, 1], [], []>} : vector<2x32xf32>, vector<32x128xf32>, vector<2x128xf32> -> vector<2x128xf32>
    %179 = arith.addf %177, %178 : vector<2x128xf32>
    %180 = vector.extract_strided_slice %179 {offsets = [0, 0], sizes = [2, 96], strides = [1, 1]} : vector<2x128xf32> to vector<2x96xf32>
    %181 = arith.negf %180 : vector<2x96xf32>
    %182 = math.exp %181 : vector<2x96xf32>
    %cst_69 = arith.constant 1.000000e+00 : f32
    %183 = vector.broadcast %cst_69 : f32 to vector<2x96xf32>
    %184 = arith.addf %183, %182 : vector<2x96xf32>
    %185 = arith.divf %183, %184 : vector<2x96xf32>
    %186 = vector.extract_strided_slice %179 {offsets = [0, 96], sizes = [2, 32], strides = [1, 1]} : vector<2x128xf32> to vector<2x32xf32>
    %187 = math.tanh %186 : vector<2x32xf32>
    %188 = vector.extract_strided_slice %185 {offsets = [0, 0], sizes = [2, 32], strides = [1, 1]} : vector<2x96xf32> to vector<2x32xf32>
    %189 = vector.extract_strided_slice %185 {offsets = [0, 32], sizes = [2, 32], strides = [1, 1]} : vector<2x96xf32> to vector<2x32xf32>
    %190 = vector.extract_strided_slice %185 {offsets = [0, 64], sizes = [2, 32], strides = [1, 1]} : vector<2x96xf32> to vector<2x32xf32>
    %191 = arith.mulf %189, %170 : vector<2x32xf32>
    %192 = arith.mulf %188, %187 : vector<2x32xf32>
    %193 = arith.addf %191, %192 : vector<2x32xf32>
    %194 = math.tanh %193 : vector<2x32xf32>
    %195 = arith.mulf %190, %194 : vector<2x32xf32>
    %c7_70 = arith.constant 7 : index
    %c0_71 = arith.constant 0 : index
    %c0_72 = arith.constant 0 : index
    %196 = vector.load %arg15[%c7_70, %c0_71, %c0_72] : memref<8x2x32xf32, #tpu.memory_space<vmem>>, vector<1x2x32xf32>
    %197 = vector.shape_cast %196 : vector<1x2x32xf32> to vector<2x32xf32>
    %198 = vector.shape_cast %195 : vector<2x32xf32> to vector<1x2x32xf32>
    tpu.vector_store %arg15[%c7_70, %c0_71, %c0_72], %198 {strides = array<i32>} : memref<8x2x32xf32, #tpu.memory_space<vmem>>, vector<1x2x32xf32>,
    %c0_73 = arith.constant 0 : index
    %c0_74 = arith.constant 0 : index
    %199 = vector.load %arg13[%c0_73, %c0_74] : memref<2x32xf32, #tpu.memory_space<vmem>>, vector<2x32xf32>
    tpu.vector_store %arg13[%c0_73, %c0_74], %195 {strides = array<i32>} : memref<2x32xf32, #tpu.memory_space<vmem>>, vector<2x32xf32>,
    %c0_75 = arith.constant 0 : index
    %c0_76 = arith.constant 0 : index
    %200 = vector.load %arg14[%c0_75, %c0_76] : memref<2x32xf32, #tpu.memory_space<vmem>>, vector<2x32xf32>
    tpu.vector_store %arg14[%c0_75, %c0_76], %193 {strides = array<i32>} : memref<2x32xf32, #tpu.memory_space<vmem>>, vector<2x32xf32>,
    %c0_77 = arith.constant 0 : index
    %c0_78 = arith.constant 0 : index
    %c0_79 = arith.constant 0 : index
    %201 = vector.load %arg15[%c0_77, %c0_78, %c0_79] : memref<8x2x32xf32, #tpu.memory_space<vmem>>, vector<8x2x32xf32>
    %202 = vector.shape_cast %201 : vector<8x2x32xf32> to vector<16x32xf32>
    %c0_80 = arith.constant 0 : index
    %c0_81 = arith.constant 0 : index
    %203 = vector.load %arg6[%c0_80, %c0_81] : memref<32x16xf32, #tpu.memory_space<vmem>>, vector<32x16xf32>
    %cst_82 = arith.constant dense<0.000000e+00> : vector<16x16xf32>
    %204 = tpu.matmul %202, %203, %cst_82 {dimension_numbers = #tpu.dot_dimension_numbers<[1], [0], [0], [1], [0, 0, 1, 1], [], []>} : vector<16x32xf32>, vector<32x16xf32>, vector<16x16xf32> -> vector<16x16xf32>
    %c0_83 = arith.constant 0 : index
    %c0_84 = arith.constant 0 : index
    %205 = vector.load %arg7[%c0_83, %c0_84] : memref<1x16xf32, #tpu.memory_space<vmem>>, vector<1x16xf32>
    %206 = vector.broadcast %205 : vector<1x16xf32> to vector<16x16xf32>
    %207 = arith.addf %204, %206 : vector<16x16xf32>
    %208 = vector.extract_strided_slice %207 {offsets = [0, 0], sizes = [2, 16], strides = [1, 1]} : vector<16x16xf32> to vector<2x16xf32>
    %c0_85 = arith.constant 0 : index
    %c0_86 = arith.constant 0 : index
    %209 = vector.load %arg10[%c0_85, %c0_86] : memref<2x128xf32, #tpu.memory_space<vmem>>, vector<2x16xf32>
    tpu.vector_store %arg10[%c0_85, %c0_86], %208 {strides = array<i32>} : memref<2x128xf32, #tpu.memory_space<vmem>>, vector<2x16xf32>,
    %210 = vector.extract_strided_slice %207 {offsets = [2, 0], sizes = [2, 16], strides = [1, 1]} : vector<16x16xf32> to vector<2x16xf32>
    %c0_87 = arith.constant 0 : index
    %c16 = arith.constant 16 : index
    %211 = vector.load %arg10[%c0_87, %c16] : memref<2x128xf32, #tpu.memory_space<vmem>>, vector<2x16xf32>
    tpu.vector_store %arg10[%c0_87, %c16], %210 {strides = array<i32>} : memref<2x128xf32, #tpu.memory_space<vmem>>, vector<2x16xf32>,
    %212 = vector.extract_strided_slice %207 {offsets = [4, 0], sizes = [2, 16], strides = [1, 1]} : vector<16x16xf32> to vector<2x16xf32>
    %c0_88 = arith.constant 0 : index
    %c32 = arith.constant 32 : index
    %213 = vector.load %arg10[%c0_88, %c32] : memref<2x128xf32, #tpu.memory_space<vmem>>, vector<2x16xf32>
    tpu.vector_store %arg10[%c0_88, %c32], %212 {strides = array<i32>} : memref<2x128xf32, #tpu.memory_space<vmem>>, vector<2x16xf32>,
    %214 = vector.extract_strided_slice %207 {offsets = [6, 0], sizes = [2, 16], strides = [1, 1]} : vector<16x16xf32> to vector<2x16xf32>
    %c0_89 = arith.constant 0 : index
    %c48 = arith.constant 48 : index
    %215 = vector.load %arg10[%c0_89, %c48] : memref<2x128xf32, #tpu.memory_space<vmem>>, vector<2x16xf32>
    tpu.vector_store %arg10[%c0_89, %c48], %214 {strides = array<i32>} : memref<2x128xf32, #tpu.memory_space<vmem>>, vector<2x16xf32>,
    %216 = vector.extract_strided_slice %207 {offsets = [8, 0], sizes = [2, 16], strides = [1, 1]} : vector<16x16xf32> to vector<2x16xf32>
    %c0_90 = arith.constant 0 : index
    %c64 = arith.constant 64 : index
    %217 = vector.load %arg10[%c0_90, %c64] : memref<2x128xf32, #tpu.memory_space<vmem>>, vector<2x16xf32>
    tpu.vector_store %arg10[%c0_90, %c64], %216 {strides = array<i32>} : memref<2x128xf32, #tpu.memory_space<vmem>>, vector<2x16xf32>,
    %218 = vector.extract_strided_slice %207 {offsets = [10, 0], sizes = [2, 16], strides = [1, 1]} : vector<16x16xf32> to vector<2x16xf32>
    %c0_91 = arith.constant 0 : index
    %c80 = arith.constant 80 : index
    %219 = vector.load %arg10[%c0_91, %c80] : memref<2x128xf32, #tpu.memory_space<vmem>>, vector<2x16xf32>
    tpu.vector_store %arg10[%c0_91, %c80], %218 {strides = array<i32>} : memref<2x128xf32, #tpu.memory_space<vmem>>, vector<2x16xf32>,
    %220 = vector.extract_strided_slice %207 {offsets = [12, 0], sizes = [2, 16], strides = [1, 1]} : vector<16x16xf32> to vector<2x16xf32>
    %c0_92 = arith.constant 0 : index
    %c96 = arith.constant 96 : index
    %221 = vector.load %arg10[%c0_92, %c96] : memref<2x128xf32, #tpu.memory_space<vmem>>, vector<2x16xf32>
    tpu.vector_store %arg10[%c0_92, %c96], %220 {strides = array<i32>} : memref<2x128xf32, #tpu.memory_space<vmem>>, vector<2x16xf32>,
    %222 = vector.extract_strided_slice %207 {offsets = [14, 0], sizes = [2, 16], strides = [1, 1]} : vector<16x16xf32> to vector<2x16xf32>
    %c0_93 = arith.constant 0 : index
    %c112 = arith.constant 112 : index
    %223 = vector.load %arg10[%c0_93, %c112] : memref<2x128xf32, #tpu.memory_space<vmem>>, vector<2x16xf32>
    tpu.vector_store %arg10[%c0_93, %c112], %222 {strides = array<i32>} : memref<2x128xf32, #tpu.memory_space<vmem>>, vector<2x16xf32>,
    %c0_i32_94 = arith.constant 0 : i32
    %224 = arith.cmpi eq, %arg1, %c0_i32_94 : i32
    %225 = arith.extui %224 : i1 to i32
    %c0_i32_95 = arith.constant 0 : i32
    %226 = arith.cmpi ne, %225, %c0_i32_95 : i32
    scf.if %226 {
      %c0_96 = arith.constant 0 : index
      %c0_97 = arith.constant 0 : index
      %227 = vector.load %arg11[%c0_96, %c0_97] : memref<2x32xf32, #tpu.memory_space<vmem>>, vector<2x32xf32>
      tpu.vector_store %arg11[%c0_96, %c0_97], %195 {strides = array<i32>} : memref<2x32xf32, #tpu.memory_space<vmem>>, vector<2x32xf32>,
      %c0_98 = arith.constant 0 : index
      %c0_99 = arith.constant 0 : index
      %228 = vector.load %arg12[%c0_98, %c0_99] : memref<2x32xf32, #tpu.memory_space<vmem>>, vector<2x32xf32>
      tpu.vector_store %arg12[%c0_98, %c0_99], %193 {strides = array<i32>} : memref<2x32xf32, #tpu.memory_space<vmem>>, vector<2x32xf32>,
    } else {
    }
    return
  }
  func.func @transform_0(%arg0: i32, %arg1: i32) -> (i32, i32, i32) {
    %c0_i32 = arith.constant 0 : i32
    %c0_i32_0 = arith.constant 0 : i32
    return %arg0, %arg1, %c0_i32 : i32, i32, i32
  }
  func.func @transform_1(%arg0: i32, %arg1: i32) -> (i32, i32) {
    %c0_i32 = arith.constant 0 : i32
    %c0_i32_0 = arith.constant 0 : i32
    %c0_i32_1 = arith.constant 0 : i32
    return %c0_i32, %c0_i32_0 : i32, i32
  }
  func.func @transform_2(%arg0: i32, %arg1: i32) -> (i32, i32) {
    %c0_i32 = arith.constant 0 : i32
    %c0_i32_0 = arith.constant 0 : i32
    %c0_i32_1 = arith.constant 0 : i32
    return %c0_i32, %c0_i32_0 : i32, i32
  }
  func.func @transform_3(%arg0: i32, %arg1: i32) -> (i32, i32) {
    %c0_i32 = arith.constant 0 : i32
    %c0_i32_0 = arith.constant 0 : i32
    %c0_i32_1 = arith.constant 0 : i32
    return %c0_i32, %c0_i32_0 : i32, i32
  }
  func.func @transform_4(%arg0: i32, %arg1: i32) -> (i32, i32) {
    %c0_i32 = arith.constant 0 : i32
    %c0_i32_0 = arith.constant 0 : i32
    %c0_i32_1 = arith.constant 0 : i32
    return %c0_i32, %c0_i32_0 : i32, i32
  }
  func.func @transform_5(%arg0: i32, %arg1: i32) -> (i32, i32) {
    %c0_i32 = arith.constant 0 : i32
    %c0_i32_0 = arith.constant 0 : i32
    %c0_i32_1 = arith.constant 0 : i32
    return %c0_i32, %c0_i32_0 : i32, i32
  }
  func.func @transform_6(%arg0: i32, %arg1: i32) -> (i32, i32) {
    %c0_i32 = arith.constant 0 : i32
    %c0_i32_0 = arith.constant 0 : i32
    return %arg0, %c0_i32 : i32, i32
  }
  func.func @transform_7(%arg0: i32, %arg1: i32) -> (i32, i32) {
    %c0_i32 = arith.constant 0 : i32
    %c0_i32_0 = arith.constant 0 : i32
    return %arg0, %c0_i32 : i32, i32
  }
  func.func @transform_8(%arg0: i32, %arg1: i32) -> (i32, i32) {
    %c0_i32 = arith.constant 0 : i32
    return %arg0, %arg1 : i32, i32
  }
  func.func @transform_9(%arg0: i32, %arg1: i32) -> (i32, i32) {
    %c0_i32 = arith.constant 0 : i32
    %c0_i32_0 = arith.constant 0 : i32
    return %arg0, %c0_i32 : i32, i32
  }
  func.func @transform_10(%arg0: i32, %arg1: i32) -> (i32, i32) {
    %c0_i32 = arith.constant 0 : i32
    %c0_i32_0 = arith.constant 0 : i32
    return %arg0, %c0_i32 : i32, i32
  }
}

</mosaic_0001>

<llo_original>
// kernel: tpu_custom_call.1
$region0: #{tpu_custom_call.1}
  #allocation0 [shape = 'u32[]', space=smem, size = 0x4, offset = 0x4, fixed_abs, tag = 'smem constant byte address 0x4 - core index']
  #allocation1 [shape = 'u32[144,128]{1,0:T(1,128)}', space=vmem, size = 0x12000, scoped, tag = 'internal scratch']
  #allocation2 [shape = 'f32[2,32]{1,0:T(2,128)}', space=vmem, size = 0x400, scoped, tag = 'scratch operand']
  #allocation3 [shape = 'f32[2,32]{1,0:T(2,128)}', space=vmem, size = 0x400, scoped, tag = 'scratch operand']
  #allocation4 [shape = 'f32[8,2,32]{2,1,0:T(2,128)}', space=vmem, size = 0x2000, scoped, tag = 'scratch operand']
  #allocation5 [shape = 'f32[2,8,128]{2,1,0:T(8,128)}', space=vmem, size = 0x2000, scoped, tag = 'scratch operand']
  %s0 = inlined_call_operand.vmem [shape: f32[2,8,16], index: 0, kind: input, shape index: {}]
  %s1 = inlined_call_operand.hbm [shape: f32[16,128], index: 1, kind: input, shape index: {}]
  %s2 = inlined_call_operand.vmem [shape: f32[32,128], index: 2, kind: input, shape index: {}]
  %s3 = inlined_call_operand.vmem [shape: f32[1,128], index: 3, kind: input, shape index: {}]
  %s4 = inlined_call_operand.vmem [shape: f32[32,16], index: 4, kind: input, shape index: {}]
  %s5 = inlined_call_operand.vmem [shape: f32[1,16], index: 5, kind: input, shape index: {}]
  %s6 = inlined_call_operand.vmem [shape: f32[2,32], index: 6, kind: input, shape index: {}]
  %s7 = inlined_call_operand.vmem [shape: f32[2,32], index: 7, kind: input, shape index: {}]
  %s8 = inlined_call_operand.hbm [shape: f32[2,128], index: 8, kind: output, shape index: {0}]
  %s9 = inlined_call_operand.hbm [shape: f32[2,32], index: 9, kind: output, shape index: {1}]
  %s10 = inlined_call_operand.hbm [shape: f32[2,32], index: 10, kind: output, shape index: {2}]
  %11 = xla_tuple %s8, %s9, %s10
  %s12 = sld [smem:[#allocation0]]
  $region70: #{tpu_custom_call.1} parent=0
    _
  %s14 = ssub.s32 1, %s12
  %s15 = scalar_select 0, %s14, %s12
  $region1: #{tpu_custom_call.1} parent=0
    #allocation6 [shape = 'u8[8192]{0}', space=vmem, size = 0x2000, scoped, tag = 'input window, operand 1, single buffered']
    #allocation7 [shape = 's32[1]{0}', space=sflag, size = 0x4, scoped, tag = 'scoped memory for tpu_custom_call.1']
    #allocation8 [shape = 's32[1]{0}', space=sflag, size = 0x4, scoped, tag = 'scoped memory for tpu_custom_call.1']
    #allocation9 [shape = 'u8[1024]{0}', space=vmem, size = 0x400, scoped, tag = 'output window, operand 0, single buffered']
    #allocation10 [shape = 'u8[1024]{0}', space=vmem, size = 0x400, scoped, tag = 'output window, operand 1, single buffered']
    #allocation11 [shape = 's32[1]{0}', space=sflag, size = 0x4, scoped, tag = 'scoped memory for tpu_custom_call.1']
    #allocation12 [shape = 'u8[1024]{0}', space=vmem, size = 0x400, scoped, tag = 'output window, operand 2, single buffered']
    %16 = vsyncpa [#allocation7], 0
    %17 = vsyncpa [#allocation8], 0
    %18 = vsyncpa [#allocation11], 0
    // Predicated region
    $region2: #{tpu_custom_call.1} parent=1 // pred_check
      _
    $region3: #{tpu_custom_call.1} parent=1 // pred_check_branch
      %20 = sbr.rel (0) target = $region5
    $region4: #{tpu_custom_call.1} parent=1 // pred_region
      _
    $region5: #{tpu_custom_call.1} parent=1 // pred_fallthru
      _
    // Predicated region
    $region6: #{tpu_custom_call.1} parent=1 // pred_check
      _
    $region7: #{tpu_custom_call.1} parent=1 // pred_check_branch
      %22 = sbr.rel (0) target = $region9
    $region8: #{tpu_custom_call.1} parent=1 // pred_region
      %s24 = ssub.s32 256, 256
      %25 = vsyncadd [#allocation7], %s24
      %s26 = sshll.u32 [#allocation6], 4
      %s27 = int_to_ptr.vmem [resolvable:$true] %s26
      %32 = dma.hbm_to_vmem [thread:$0]  %s1, 256, %s27, [#allocation7], 128, 128, 8
    $region9: #{tpu_custom_call.1} parent=1 // pred_fallthru
      _
    // Predicated region
    $region10: #{tpu_custom_call.1} parent=1 // pred_check
      _
    $region11: #{tpu_custom_call.1} parent=1 // pred_check_branch
      %34 = sbr.rel (0) target = $region13
    $region12: #{tpu_custom_call.1} parent=1 // pred_region
      _
    $region13: #{tpu_custom_call.1} parent=1 // pred_fallthru
      _
    // Predicated region
    $region14: #{tpu_custom_call.1} parent=1 // pred_check
      _
    $region15: #{tpu_custom_call.1} parent=1 // pred_check_branch
      %36 = sbr.rel (0) target = $region17
    $region16: #{tpu_custom_call.1} parent=1 // pred_region
      _
    $region17: #{tpu_custom_call.1} parent=1 // pred_fallthru
      _
    // Predicated region
    $region18: #{tpu_custom_call.1} parent=1 // pred_check
      _
    $region19: #{tpu_custom_call.1} parent=1 // pred_check_branch
      %38 = sbr.rel (0) target = $region21
    $region20: #{tpu_custom_call.1} parent=1 // pred_region
      _
    $region21: #{tpu_custom_call.1} parent=1 // pred_fallthru
      _
    // Predicated region
    $region22: #{tpu_custom_call.1} parent=1 // pred_check
      _
    $region23: #{tpu_custom_call.1} parent=1 // pred_check_branch
      %40 = sbr.rel (0) target = $region25
    $region24: #{tpu_custom_call.1} parent=1 // pred_region
      _
    $region25: #{tpu_custom_call.1} parent=1 // pred_fallthru
      _
    // Predicated region
    $region26: #{tpu_custom_call.1} parent=1 // pred_check
      _
    $region27: #{tpu_custom_call.1} parent=1 // pred_check_branch
      %42 = sbr.rel (0) target = $region29
    $region28: #{tpu_custom_call.1} parent=1 // pred_region
      _
    $region29: #{tpu_custom_call.1} parent=1 // pred_fallthru
      _
    // Predicated region
    $region30: #{tpu_custom_call.1} parent=1 // pred_check
      _
    $region31: #{tpu_custom_call.1} parent=1 // pred_check_branch
      %44 = sbr.rel (0) target = $region33
    $region32: #{tpu_custom_call.1} parent=1 // pred_region
      _
    $region33: #{tpu_custom_call.1} parent=1 // pred_fallthru
      _
    // Predicated region
    $region34: #{tpu_custom_call.1} parent=1 // pred_check
      _
    $region35: #{tpu_custom_call.1} parent=1 // pred_check_branch
      %46 = sbr.rel (0) target = $region37
    $region36: #{tpu_custom_call.1} parent=1 // pred_region
      %47 = dma.done [#allocation7], 256
    $region37: #{tpu_custom_call.1} parent=1 // pred_fallthru
      _
    %p48 = scmp.eq.s32.totalorder 0, 0
    // Predicated region
    $region38: #{tpu_custom_call.1} parent=1 // pred_check
      %p49 = pneg %p48
    $region39: #{tpu_custom_call.1} parent=1 // pred_check_branch
      %51 = sbr.rel (%p49) target = $region41
    $region40: #{tpu_custom_call.1} parent=1 // pred_region
      %v52 = vld [vmem:[%s6] sm:$0x3]
      %vm53 = vcmask 254976
      %54 = vst.msk [vmem:[#allocation2] sm:$0x3] %vm53, %v52
      %v55 = vld [vmem:[%s7] sm:$0x3]
      %56 = vst.msk [vmem:[#allocation3] sm:$0x3] %vm53, %v55
    $region41: #{tpu_custom_call.1} parent=1 // pred_fallthru
      _
    %v57 = vld [vmem:[%s0] sm:$0xff]
    %v58 = vld [vmem:[%s0 + $0x8] sm:$0xff]
    %v59 = vld [vmem:[#allocation6] sm:$0xff]
    %v60 = vld [vmem:[#allocation6 + $0x8] sm:$0xff]
    %v61 = vld [vmem:[%s3] sm:$0x1]
    %v63 = vlaneseq
    %v64 = vshrl.u32 %v63, 7
    %v65 = vsub.s32 0, %v64
    %v66 = vrot.slane %v61, %v65
    %vm68 = vcmask 130048
    %v70 = vsel %vm68, %v57, 0
    %v73 = vsel %vm68, %v58, 0
    %75 = vmatprep.subr.mxu0 0.0
    %76 = vmatpush1.msra.mxu0 %v59
    %77 = vmatprep.subr.mxu0 0.0
    %78 = vmatpush1.msra.mxu0 %v60
    %79 = vmatprep.subr.mxu0 0.0
    %80 = vmatpush1.msra.mxu0 0.0
    %81 = vmatprep.subr.mxu0 0.0
    %82 = vmatpush1.msra.mxu0 0.0
    %83 = vmatprep.subr.mxu0 0.0
    %84 = vmatpush1.msra.mxu0 0.0
    %85 = vmatprep.subr.mxu0 0.0
    %86 = vmatpush1.msra.mxu0 0.0
    %87 = vmatprep.subr.mxu0 0.0
    %88 = vmatpush1.msra.mxu0 0.0
    %89 = vmatprep.subr.mxu0 0.0
    %90 = vmatpush1.msra.mxu0 0.0
    %91 = vmatprep.subr.mxu0 0.0
    %92 = vmatpush1.msra.mxu0 0.0
    %93 = vmatprep.subr.mxu0 0.0
    %94 = vmatpush1.msra.mxu0 0.0
    %95 = vmatprep.subr.mxu0 0.0
    %96 = vmatpush1.msra.mxu0 0.0
    %97 = vmatprep.subr.mxu0 0.0
    %98 = vmatpush1.msra.mxu0 0.0
    %99 = vmatprep.subr.mxu0 0.0
    %100 = vmatpush1.msra.mxu0 0.0
    %101 = vmatprep.subr.mxu0 0.0
    %102 = vmatpush1.msra.mxu0 0.0
    %103 = vmatprep.subr.mxu0 0.0
    %104 = vmatpush1.msra.mxu0 0.0
    %105 = vmatprep.subr.mxu0 0.0
    %106 = vmatpush1.msra.mxu0 0.0
    %107 = vmatprep.subr.mxu0 0.0
    %108 = vmatpush1.msra.mxu0 0.0
    %109 = vmatprep.subr.mxu0 0.0
    %110 = vmatpush1.msra.mxu0 0.0
    %111 = vmatprep.subr.mxu0 0.0
    %112 = vmatpush1.msra.mxu0 0.0
    %113 = vmatprep.subr.mxu0 0.0
    %114 = vmatpush1.msra.mxu0 0.0
    %115 = vmatprep.subr.mxu0 0.0
    %116 = vmatpush1.msra.mxu0 0.0
    %117 = vmatprep.subr.mxu0 0.0
    %118 = vmatpush1.msra.mxu0 0.0
    %119 = vmatprep.subr.mxu0 0.0
    %120 = vmatpush1.msra.mxu0 0.0
    %121 = vmatprep.subr.mxu0 0.0
    %122 = vmatpush1.msra.mxu0 0.0
    %123 = vmatprep.subr.mxu0 0.0
    %124 = vmatpush1.msra.mxu0 0.0
    %125 = vmatprep.subr.mxu0 0.0
    %126 = vmatpush1.msra.mxu0 0.0
    %127 = vmatprep.subr.mxu0 0.0
    %128 = vmatpush1.msra.mxu0 0.0
    %129 = vmatprep.subr.mxu0 0.0
    %130 = vmatpush1.msra.mxu0 0.0
    %131 = vmatprep.subr.mxu0 0.0
    %132 = vmatpush1.msra.mxu0 0.0
    %133 = vmatprep.subr.mxu0 0.0
    %134 = vmatpush1.msra.mxu0 0.0
    %135 = vmatprep.subr.mxu0 0.0
    %136 = vmatpush1.msra.mxu0 0.0
    %137 = vmatprep.subr.mxu0 0.0
    %138 = vmatpush1.msra.mxu0 0.0
    %139 = vmatprep.mubr.f32.mxu0 0.0
    %140 = vmatmul.mubr.f32.gmra.mrb[0].mxu0 %v70
    %v141 = vpop.f32.mrb[0].mxu0
    %v142 = vadd.f32 %v66, %v141
    %v143 = vpop.f32.mrb[0].mxu0
    %144 = vmatprep.mubr.f32.mxu0 0.0
    %145 = vmatmul.mubr.f32.gmra.mrb[0].mxu0 %v73
    %v146 = vpop.f32.mrb[0].mxu0
    %v147 = vadd.f32 %v66, %v146
    %v148 = vpop.f32.mrb[0].mxu0
    %149 = vdwg.mxu0
    %150 = vst [vmem:[#allocation5] sm:$0xff] %v142
    %151 = vst [vmem:[#allocation5 + $0x8] sm:$0xff] %v147
    %v152 = vld [vmem:[%s2] sm:$0xff]
    %v153 = vld [vmem:[%s2 + $0x8] sm:$0xff]
    %v154 = vld [vmem:[%s2 + $0x10] sm:$0xff]
    %v155 = vld [vmem:[%s2 + $0x18] sm:$0xff]
    %v156 = vld [vmem:[#allocation2] sm:$0x3]
    %v157 = vld [vmem:[#allocation3] sm:$0x3]
    %v158 = vld [vmem:[#allocation5] sm:$0x1]
    %v159 = vld [vmem:[#allocation5 + $0x8] sm:$0x1]
    %vm160 = vcmask 261120
    %v162 = vsel %vm160, %v156, 0
    %164 = vmatprep.subr.mxu0 0.0
    %165 = vmatpush1.msra.mxu0 %v152
    %166 = vmatprep.subr.mxu0 0.0
    %167 = vmatpush1.msra.mxu0 %v153
    %168 = vmatprep.subr.mxu0 0.0
    %169 = vmatpush1.msra.mxu0 %v154
    %170 = vmatprep.subr.mxu0 0.0
    %171 = vmatpush1.msra.mxu0 %v155
    %172 = vmatprep.subr.mxu0 0.0
    %173 = vmatpush1.msra.mxu0 0.0
    %174 = vmatprep.subr.mxu0 0.0
    %175 = vmatpush1.msra.mxu0 0.0
    %176 = vmatprep.subr.mxu0 0.0
    %177 = vmatpush1.msra.mxu0 0.0
    %178 = vmatprep.subr.mxu0 0.0
    %179 = vmatpush1.msra.mxu0 0.0
    %180 = vmatprep.subr.mxu0 0.0
    %181 = vmatpush1.msra.mxu0 0.0
    %182 = vmatprep.subr.mxu0 0.0
    %183 = vmatpush1.msra.mxu0 0.0
    %184 = vmatprep.subr.mxu0 0.0
    %185 = vmatpush1.msra.mxu0 0.0
    %186 = vmatprep.subr.mxu0 0.0
    %187 = vmatpush1.msra.mxu0 0.0
    %188 = vmatprep.subr.mxu0 0.0
    %189 = vmatpush1.msra.mxu0 0.0
    %190 = vmatprep.subr.mxu0 0.0
    %191 = vmatpush1.msra.mxu0 0.0
    %192 = vmatprep.subr.mxu0 0.0
    %193 = vmatpush1.msra.mxu0 0.0
    %194 = vmatprep.subr.mxu0 0.0
    %195 = vmatpush1.msra.mxu0 0.0
    %196 = vmatprep.subr.mxu0 0.0
    %197 = vmatpush1.msra.mxu0 0.0
    %198 = vmatprep.subr.mxu0 0.0
    %199 = vmatpush1.msra.mxu0 0.0
    %200 = vmatprep.subr.mxu0 0.0
    %201 = vmatpush1.msra.mxu0 0.0
    %202 = vmatprep.subr.mxu0 0.0
    %203 = vmatpush1.msra.mxu0 0.0
    %204 = vmatprep.subr.mxu0 0.0
    %205 = vmatpush1.msra.mxu0 0.0
    %206 = vmatprep.subr.mxu0 0.0
    %207 = vmatpush1.msra.mxu0 0.0
    %208 = vmatprep.subr.mxu0 0.0
    %209 = vmatpush1.msra.mxu0 0.0
    %210 = vmatprep.subr.mxu0 0.0
    %211 = vmatpush1.msra.mxu0 0.0
    %212 = vmatprep.subr.mxu0 0.0
    %213 = vmatpush1.msra.mxu0 0.0
    %214 = vmatprep.subr.mxu0 0.0
    %215 = vmatpush1.msra.mxu0 0.0
    %216 = vmatprep.subr.mxu0 0.0
    %217 = vmatpush1.msra.mxu0 0.0
    %218 = vmatprep.subr.mxu0 0.0
    %219 = vmatpush1.msra.mxu0 0.0
    %220 = vmatprep.subr.mxu0 0.0
    %221 = vmatpush1.msra.mxu0 0.0
    %222 = vmatprep.subr.mxu0 0.0
    %223 = vmatpush1.msra.mxu0 0.0
    %224 = vmatprep.subr.mxu0 0.0
    %225 = vmatpush1.msra.mxu0 0.0
    %226 = vmatprep.subr.mxu0 0.0
    %227 = vmatpush1.msra.mxu0 0.0
    %228 = vmatprep.mubr.f32.mxu0 0.0
    %229 = vmatmul.mubr.f32.gmra.mrb[0].mxu0 %v162
    %v230 = vpop.f32.mrb[0].mxu0
    %v231 = vadd.f32 0.0, %v230
    %v232 = vpop.f32.mrb[0].mxu0
    %233 = vdwg.mxu0
    %v235 = vrot.slane %v231, 1
    %v238 = vadd.f32 %v158, %v231
    %v239 = vadd.f32 %v159, %v235
    %v240 = vxor.u32 %v238, 2147483648
    %v241 = vxor.u32 %v239, 2147483648
    %v242 = vmul.f32 %v240, 1.442695
    %v243 = vpow.pop %v242
    %v244 = vmul.f32 %v241, 1.442695
    %v245 = vpow.pop %v244
    %v246 = vadd.f32 %v243, 1.0
    %v247 = vadd.f32 %v245, 1.0
    %v248 = vrcp.pop %v246
    %v249 = vmul.f32 1.0, %v248
    %v250 = vrcp.pop %v247
    %v251 = vmul.f32 1.0, %v250
    %v252 = vtanh.pop %v238
    %v253 = vtanh.pop %v239
    %v255 = vrot.slane %v157, 1
    %256 = vrot.lane.b32.xlu0 %v157, 32
    %v257 = vpop.permute.xlu0 %256
    %258 = vrot.lane.b32.xlu0 %v255, 32
    %v259 = vpop.permute.xlu0 %258
    %v262 = vmul.f32 %v249, %v257
    %v263 = vmul.f32 %v251, %v259
    %266 = vrot.lane.b32.xlu0 %v252, 32
    %v267 = vpop.permute.xlu0 %266
    %268 = vrot.lane.b32.xlu0 %v253, 32
    %v269 = vpop.permute.xlu0 %268
    %v272 = vmul.f32 %v249, %v267
    %v273 = vmul.f32 %v251, %v269
    %276 = vrot.lane.b32.xlu0 %v272, 32
    %v277 = vpop.permute.xlu0 %276
    %278 = vrot.lane.b32.xlu0 %v273, 32
    %v279 = vpop.permute.xlu0 %278
    %v282 = vadd.f32 %v262, %v277
    %v283 = vadd.f32 %v263, %v279
    %v284 = vtanh.pop %v282
    %v285 = vtanh.pop %v283
    %288 = vrot.lane.b32.xlu0 %v284, 32
    %v289 = vpop.permute.xlu0 %288
    %290 = vrot.lane.b32.xlu0 %v285, 32
    %v291 = vpop.permute.xlu0 %290
    %v294 = vmul.f32 %v249, %v289
    %v295 = vmul.f32 %v251, %v291
    %v298 = vrot.slane %v295, 7
    %vm299 = vcmask 1041409
    %v300 = vsel %vm299, %v298, %v294
    %301 = vrot.lane.b32.xlu0 %v300, 64
    %v302 = vpop.permute.xlu0 %301
    %vm304 = vcmask 254976
    %305 = vst.msk [vmem:[#allocation4] sm:$0x3] %vm304, %v302
    %v306 = vld [vmem:[#allocation5 + $0x1] sm:$0x1]
    %v307 = vld [vmem:[#allocation5 + $0x9] sm:$0x1]
    %v308 = vsel %vm160, %v302, 0
    %310 = vmatprep.subr.mxu0 0.0
    %311 = vmatpush1.msra.mxu0 %v152
    %312 = vmatprep.subr.mxu0 0.0
    %313 = vmatpush1.msra.mxu0 %v153
    %314 = vmatprep.subr.mxu0 0.0
    %315 = vmatpush1.msra.mxu0 %v154
    %316 = vmatprep.subr.mxu0 0.0
    %317 = vmatpush1.msra.mxu0 %v155
    %318 = vmatprep.subr.mxu0 0.0
    %319 = vmatpush1.msra.mxu0 0.0
    %320 = vmatprep.subr.mxu0 0.0
    %321 = vmatpush1.msra.mxu0 0.0
    %322 = vmatprep.subr.mxu0 0.0
    %323 = vmatpush1.msra.mxu0 0.0
    %324 = vmatprep.subr.mxu0 0.0
    %325 = vmatpush1.msra.mxu0 0.0
    %326 = vmatprep.subr.mxu0 0.0
    %327 = vmatpush1.msra.mxu0 0.0
    %328 = vmatprep.subr.mxu0 0.0
    %329 = vmatpush1.msra.mxu0 0.0
    %330 = vmatprep.subr.mxu0 0.0
    %331 = vmatpush1.msra.mxu0 0.0
    %332 = vmatprep.subr.mxu0 0.0
    %333 = vmatpush1.msra.mxu0 0.0
    %334 = vmatprep.subr.mxu0 0.0
    %335 = vmatpush1.msra.mxu0 0.0
    %336 = vmatprep.subr.mxu0 0.0
    %337 = vmatpush1.msra.mxu0 0.0
    %338 = vmatprep.subr.mxu0 0.0
    %339 = vmatpush1.msra.mxu0 0.0
    %340 = vmatprep.subr.mxu0 0.0
    %341 = vmatpush1.msra.mxu0 0.0
    %342 = vmatprep.subr.mxu0 0.0
    %343 = vmatpush1.msra.mxu0 0.0
    %344 = vmatprep.subr.mxu0 0.0
    %345 = vmatpush1.msra.mxu0 0.0
    %346 = vmatprep.subr.mxu0 0.0
    %347 = vmatpush1.msra.mxu0 0.0
    %348 = vmatprep.subr.mxu0 0.0
    %349 = vmatpush1.msra.mxu0 0.0
    %350 = vmatprep.subr.mxu0 0.0
    %351 = vmatpush1.msra.mxu0 0.0
    %352 = vmatprep.subr.mxu0 0.0
    %353 = vmatpush1.msra.mxu0 0.0
    %354 = vmatprep.subr.mxu0 0.0
    %355 = vmatpush1.msra.mxu0 0.0
    %356 = vmatprep.subr.mxu0 0.0
    %357 = vmatpush1.msra.mxu0 0.0
    %358 = vmatprep.subr.mxu0 0.0
    %359 = vmatpush1.msra.mxu0 0.0
    %360 = vmatprep.subr.mxu0 0.0
    %361 = vmatpush1.msra.mxu0 0.0
    %362 = vmatprep.subr.mxu0 0.0
    %363 = vmatpush1.msra.mxu0 0.0
    %364 = vmatprep.subr.mxu0 0.0
    %365 = vmatpush1.msra.mxu0 0.0
    %366 = vmatprep.subr.mxu0 0.0
    %367 = vmatpush1.msra.mxu0 0.0
    %368 = vmatprep.subr.mxu0 0.0
    %369 = vmatpush1.msra.mxu0 0.0
    %370 = vmatprep.subr.mxu0 0.0
    %371 = vmatpush1.msra.mxu0 0.0
    %372 = vmatprep.subr.mxu0 0.0
    %373 = vmatpush1.msra.mxu0 0.0
    %374 = vmatprep.mubr.f32.mxu0 0.0
    %375 = vmatmul.mubr.f32.gmra.mrb[0].mxu0 %v308
    %v376 = vpop.f32.mrb[0].mxu0
    %v377 = vadd.f32 0.0, %v376
    %v378 = vpop.f32.mrb[0].mxu0
    %379 = vdwg.mxu0
    %v381 = vrot.slane %v377, 1
    %v384 = vadd.f32 %v306, %v377
    %v385 = vadd.f32 %v307, %v381
    %v386 = vxor.u32 %v384, 2147483648
    %v387 = vxor.u32 %v385, 2147483648
    %v388 = vmul.f32 %v386, 1.442695
    %v389 = vpow.pop %v388
    %v390 = vmul.f32 %v387, 1.442695
    %v391 = vpow.pop %v390
    %v392 = vadd.f32 %v389, 1.0
    %v393 = vadd.f32 %v391, 1.0
    %v394 = vrcp.pop %v392
    %v395 = vmul.f32 1.0, %v394
    %v396 = vrcp.pop %v393
    %v397 = vmul.f32 1.0, %v396
    %v398 = vtanh.pop %v384
    %v399 = vtanh.pop %v385
    %v400 = vmul.f32 %v395, %v282
    %v401 = vmul.f32 %v397, %v283
    %404 = vrot.lane.b32.xlu0 %v398, 32
    %v405 = vpop.permute.xlu0 %404
    %406 = vrot.lane.b32.xlu0 %v399, 32
    %v407 = vpop.permute.xlu0 %406
    %v410 = vmul.f32 %v395, %v405
    %v411 = vmul.f32 %v397, %v407
    %414 = vrot.lane.b32.xlu0 %v410, 32
    %v415 = vpop.permute.xlu0 %414
    %416 = vrot.lane.b32.xlu0 %v411, 32
    %v417 = vpop.permute.xlu0 %416
    %v420 = vadd.f32 %v400, %v415
    %v421 = vadd.f32 %v401, %v417
    %v422 = vtanh.pop %v420
    %v423 = vtanh.pop %v421
    %426 = vrot.lane.b32.xlu0 %v422, 32
    %v427 = vpop.permute.xlu0 %426
    %428 = vrot.lane.b32.xlu0 %v423, 32
    %v429 = vpop.permute.xlu0 %428
    %v432 = vmul.f32 %v395, %v427
    %v433 = vmul.f32 %v397, %v429
    %v436 = vrot.slane %v433, 7
    %v437 = vsel %vm299, %v436, %v432
    %438 = vrot.lane.b32.xlu0 %v437, 64
    %v439 = vpop.permute.xlu0 %438
    %s441 = scalar_lea.vmem [#allocation4], 2
    %442 = vst.msk [vmem:[%s441] sm:$0x3] %vm304, %v439
    %v443 = vld [vmem:[#allocation5 + $0x2] sm:$0x1]
    %v444 = vld [vmem:[#allocation5 + $0xa] sm:$0x1]
    %v445 = vsel %vm160, %v439, 0
    %447 = vmatprep.subr.mxu0 0.0
    %448 = vmatpush1.msra.mxu0 %v152
    %449 = vmatprep.subr.mxu0 0.0
    %450 = vmatpush1.msra.mxu0 %v153
    %451 = vmatprep.subr.mxu0 0.0
    %452 = vmatpush1.msra.mxu0 %v154
    %453 = vmatprep.subr.mxu0 0.0
    %454 = vmatpush1.msra.mxu0 %v155
    %455 = vmatprep.subr.mxu0 0.0
    %456 = vmatpush1.msra.mxu0 0.0
    %457 = vmatprep.subr.mxu0 0.0
    %458 = vmatpush1.msra.mxu0 0.0
    %459 = vmatprep.subr.mxu0 0.0
    %460 = vmatpush1.msra.mxu0 0.0
    %461 = vmatprep.subr.mxu0 0.0
    %462 = vmatpush1.msra.mxu0 0.0
    %463 = vmatprep.subr.mxu0 0.0
    %464 = vmatpush1.msra.mxu0 0.0
    %465 = vmatprep.subr.mxu0 0.0
    %466 = vmatpush1.msra.mxu0 0.0
    %467 = vmatprep.subr.mxu0 0.0
    %468 = vmatpush1.msra.mxu0 0.0
    %469 = vmatprep.subr.mxu0 0.0
    %470 = vmatpush1.msra.mxu0 0.0
    %471 = vmatprep.subr.mxu0 0.0
    %472 = vmatpush1.msra.mxu0 0.0
    %473 = vmatprep.subr.mxu0 0.0
    %474 = vmatpush1.msra.mxu0 0.0
    %475 = vmatprep.subr.mxu0 0.0
    %476 = vmatpush1.msra.mxu0 0.0
    %477 = vmatprep.subr.mxu0 0.0
    %478 = vmatpush1.msra.mxu0 0.0
    %479 = vmatprep.subr.mxu0 0.0
    %480 = vmatpush1.msra.mxu0 0.0
    %481 = vmatprep.subr.mxu0 0.0
    %482 = vmatpush1.msra.mxu0 0.0
    %483 = vmatprep.subr.mxu0 0.0
    %484 = vmatpush1.msra.mxu0 0.0
    %485 = vmatprep.subr.mxu0 0.0
    %486 = vmatpush1.msra.mxu0 0.0
    %487 = vmatprep.subr.mxu0 0.0
    %488 = vmatpush1.msra.mxu0 0.0
    %489 = vmatprep.subr.mxu0 0.0
    %490 = vmatpush1.msra.mxu0 0.0
    %491 = vmatprep.subr.mxu0 0.0
    %492 = vmatpush1.msra.mxu0 0.0
    %493 = vmatprep.subr.mxu0 0.0
    %494 = vmatpush1.msra.mxu0 0.0
    %495 = vmatprep.subr.mxu0 0.0
    %496 = vmatpush1.msra.mxu0 0.0
    %497 = vmatprep.subr.mxu0 0.0
    %498 = vmatpush1.msra.mxu0 0.0
    %499 = vmatprep.subr.mxu0 0.0
    %500 = vmatpush1.msra.mxu0 0.0
    %501 = vmatprep.subr.mxu0 0.0
    %502 = vmatpush1.msra.mxu0 0.0
    %503 = vmatprep.subr.mxu0 0.0
    %504 = vmatpush1.msra.mxu0 0.0
    %505 = vmatprep.subr.mxu0 0.0
    %506 = vmatpush1.msra.mxu0 0.0
    %507 = vmatprep.subr.mxu0 0.0
    %508 = vmatpush1.msra.mxu0 0.0
    %509 = vmatprep.subr.mxu0 0.0
    %510 = vmatpush1.msra.mxu0 0.0
    %511 = vmatprep.mubr.f32.mxu0 0.0
    %512 = vmatmul.mubr.f32.gmra.mrb[0].mxu0 %v445
    %v513 = vpop.f32.mrb[0].mxu0
    %v514 = vadd.f32 0.0, %v513
    %v515 = vpop.f32.mrb[0].mxu0
    %516 = vdwg.mxu0
    %v518 = vrot.slane %v514, 1
    %v521 = vadd.f32 %v443, %v514
    %v522 = vadd.f32 %v444, %v518
    %v523 = vxor.u32 %v521, 2147483648
    %v524 = vxor.u32 %v522, 2147483648
    %v525 = vmul.f32 %v523, 1.442695
    %v526 = vpow.pop %v525
    %v527 = vmul.f32 %v524, 1.442695
    %v528 = vpow.pop %v527
    %v529 = vadd.f32 %v526, 1.0
    %v530 = vadd.f32 %v528, 1.0
    %v531 = vrcp.pop %v529
    %v532 = vmul.f32 1.0, %v531
    %v533 = vrcp.pop %v530
    %v534 = vmul.f32 1.0, %v533
    %v535 = vtanh.pop %v521
    %v536 = vtanh.pop %v522
    %v537 = vmul.f32 %v532, %v420
    %v538 = vmul.f32 %v534, %v421
    %541 = vrot.lane.b32.xlu0 %v535, 32
    %v542 = vpop.permute.xlu0 %541
    %543 = vrot.lane.b32.xlu0 %v536, 32
    %v544 = vpop.permute.xlu0 %543
    %v547 = vmul.f32 %v532, %v542
    %v548 = vmul.f32 %v534, %v544
    %551 = vrot.lane.b32.xlu0 %v547, 32
    %v552 = vpop.permute.xlu0 %551
    %553 = vrot.lane.b32.xlu0 %v548, 32
    %v554 = vpop.permute.xlu0 %553
    %v557 = vadd.f32 %v537, %v552
    %v558 = vadd.f32 %v538, %v554
    %v559 = vtanh.pop %v557
    %v560 = vtanh.pop %v558
    %563 = vrot.lane.b32.xlu0 %v559, 32
    %v564 = vpop.permute.xlu0 %563
    %565 = vrot.lane.b32.xlu0 %v560, 32
    %v566 = vpop.permute.xlu0 %565
    %v569 = vmul.f32 %v532, %v564
    %v570 = vmul.f32 %v534, %v566
    %v573 = vrot.slane %v570, 7
    %v574 = vsel %vm299, %v573, %v569
    %575 = vrot.lane.b32.xlu0 %v574, 64
    %v576 = vpop.permute.xlu0 %575
    %s578 = scalar_lea.vmem [#allocation4], 4
    %579 = vst.msk [vmem:[%s578] sm:$0x3] %vm304, %v576
    %v580 = vld [vmem:[#allocation5 + $0x3] sm:$0x1]
    %v581 = vld [vmem:[#allocation5 + $0xb] sm:$0x1]
    %v582 = vsel %vm160, %v576, 0
    %584 = vmatprep.subr.mxu0 0.0
    %585 = vmatpush1.msra.mxu0 %v152
    %586 = vmatprep.subr.mxu0 0.0
    %587 = vmatpush1.msra.mxu0 %v153
    %588 = vmatprep.subr.mxu0 0.0
    %589 = vmatpush1.msra.mxu0 %v154
    %590 = vmatprep.subr.mxu0 0.0
    %591 = vmatpush1.msra.mxu0 %v155
    %592 = vmatprep.subr.mxu0 0.0
    %593 = vmatpush1.msra.mxu0 0.0
    %594 = vmatprep.subr.mxu0 0.0
    %595 = vmatpush1.msra.mxu0 0.0
    %596 = vmatprep.subr.mxu0 0.0
    %597 = vmatpush1.msra.mxu0 0.0
    %598 = vmatprep.subr.mxu0 0.0
    %599 = vmatpush1.msra.mxu0 0.0
    %600 = vmatprep.subr.mxu0 0.0
    %601 = vmatpush1.msra.mxu0 0.0
    %602 = vmatprep.subr.mxu0 0.0
    %603 = vmatpush1.msra.mxu0 0.0
    %604 = vmatprep.subr.mxu0 0.0
    %605 = vmatpush1.msra.mxu0 0.0
    %606 = vmatprep.subr.mxu0 0.0
    %607 = vmatpush1.msra.mxu0 0.0
    %608 = vmatprep.subr.mxu0 0.0
    %609 = vmatpush1.msra.mxu0 0.0
    %610 = vmatprep.subr.mxu0 0.0
    %611 = vmatpush1.msra.mxu0 0.0
    %612 = vmatprep.subr.mxu0 0.0
    %613 = vmatpush1.msra.mxu0 0.0
    %614 = vmatprep.subr.mxu0 0.0
    %615 = vmatpush1.msra.mxu0 0.0
    %616 = vmatprep.subr.mxu0 0.0
    %617 = vmatpush1.msra.mxu0 0.0
    %618 = vmatprep.subr.mxu0 0.0
    %619 = vmatpush1.msra.mxu0 0.0
    %620 = vmatprep.subr.mxu0 0.0
    %621 = vmatpush1.msra.mxu0 0.0
    %622 = vmatprep.subr.mxu0 0.0
    %623 = vmatpush1.msra.mxu0 0.0
    %624 = vmatprep.subr.mxu0 0.0
    %625 = vmatpush1.msra.mxu0 0.0
    %626 = vmatprep.subr.mxu0 0.0
    %627 = vmatpush1.msra.mxu0 0.0
    %628 = vmatprep.subr.mxu0 0.0
    %629 = vmatpush1.msra.mxu0 0.0
    %630 = vmatprep.subr.mxu0 0.0
    %631 = vmatpush1.msra.mxu0 0.0
    %632 = vmatprep.subr.mxu0 0.0
    %633 = vmatpush1.msra.mxu0 0.0
    %634 = vmatprep.subr.mxu0 0.0
    %635 = vmatpush1.msra.mxu0 0.0
    %636 = vmatprep.subr.mxu0 0.0
    %637 = vmatpush1.msra.mxu0 0.0
    %638 = vmatprep.subr.mxu0 0.0
    %639 = vmatpush1.msra.mxu0 0.0
    %640 = vmatprep.subr.mxu0 0.0
    %641 = vmatpush1.msra.mxu0 0.0
    %642 = vmatprep.subr.mxu0 0.0
    %643 = vmatpush1.msra.mxu0 0.0
    %644 = vmatprep.subr.mxu0 0.0
    %645 = vmatpush1.msra.mxu0 0.0
    %646 = vmatprep.subr.mxu0 0.0
    %647 = vmatpush1.msra.mxu0 0.0
    %648 = vmatprep.mubr.f32.mxu0 0.0
    %649 = vmatmul.mubr.f32.gmra.mrb[0].mxu0 %v582
    %v650 = vpop.f32.mrb[0].mxu0
    %v651 = vadd.f32 0.0, %v650
    %v652 = vpop.f32.mrb[0].mxu0
    %653 = vdwg.mxu0
    %v655 = vrot.slane %v651, 1
    %v658 = vadd.f32 %v580, %v651
    %v659 = vadd.f32 %v581, %v655
    %v660 = vxor.u32 %v658, 2147483648
    %v661 = vxor.u32 %v659, 2147483648
    %v662 = vmul.f32 %v660, 1.442695
    %v663 = vpow.pop %v662
    %v664 = vmul.f32 %v661, 1.442695
    %v665 = vpow.pop %v664
    %v666 = vadd.f32 %v663, 1.0
    %v667 = vadd.f32 %v665, 1.0
    %v668 = vrcp.pop %v666
    %v669 = vmul.f32 1.0, %v668
    %v670 = vrcp.pop %v667
    %v671 = vmul.f32 1.0, %v670
    %v672 = vtanh.pop %v658
    %v673 = vtanh.pop %v659
    %v674 = vmul.f32 %v669, %v557
    %v675 = vmul.f32 %v671, %v558
    %678 = vrot.lane.b32.xlu0 %v672, 32
    %v679 = vpop.permute.xlu0 %678
    %680 = vrot.lane.b32.xlu0 %v673, 32
    %v681 = vpop.permute.xlu0 %680
    %v684 = vmul.f32 %v669, %v679
    %v685 = vmul.f32 %v671, %v681
    %688 = vrot.lane.b32.xlu0 %v684, 32
    %v689 = vpop.permute.xlu0 %688
    %690 = vrot.lane.b32.xlu0 %v685, 32
    %v691 = vpop.permute.xlu0 %690
    %v694 = vadd.f32 %v674, %v689
    %v695 = vadd.f32 %v675, %v691
    %v696 = vtanh.pop %v694
    %v697 = vtanh.pop %v695
    %700 = vrot.lane.b32.xlu0 %v696, 32
    %v701 = vpop.permute.xlu0 %700
    %702 = vrot.lane.b32.xlu0 %v697, 32
    %v703 = vpop.permute.xlu0 %702
    %v706 = vmul.f32 %v669, %v701
    %v707 = vmul.f32 %v671, %v703
    %v710 = vrot.slane %v707, 7
    %v711 = vsel %vm299, %v710, %v706
    %712 = vrot.lane.b32.xlu0 %v711, 64
    %v713 = vpop.permute.xlu0 %712
    %s715 = scalar_lea.vmem [#allocation4], 6
    %716 = vst.msk [vmem:[%s715] sm:$0x3] %vm304, %v713
    %v717 = vld [vmem:[#allocation5 + $0x4] sm:$0x1]
    %v718 = vld [vmem:[#allocation5 + $0xc] sm:$0x1]
    %v719 = vsel %vm160, %v713, 0
    %721 = vmatprep.subr.mxu0 0.0
    %722 = vmatpush1.msra.mxu0 %v152
    %723 = vmatprep.subr.mxu0 0.0
    %724 = vmatpush1.msra.mxu0 %v153
    %725 = vmatprep.subr.mxu0 0.0
    %726 = vmatpush1.msra.mxu0 %v154
    %727 = vmatprep.subr.mxu0 0.0
    %728 = vmatpush1.msra.mxu0 %v155
    %729 = vmatprep.subr.mxu0 0.0
    %730 = vmatpush1.msra.mxu0 0.0
    %731 = vmatprep.subr.mxu0 0.0
    %732 = vmatpush1.msra.mxu0 0.0
    %733 = vmatprep.subr.mxu0 0.0
    %734 = vmatpush1.msra.mxu0 0.0
    %735 = vmatprep.subr.mxu0 0.0
    %736 = vmatpush1.msra.mxu0 0.0
    %737 = vmatprep.subr.mxu0 0.0
    %738 = vmatpush1.msra.mxu0 0.0
    %739 = vmatprep.subr.mxu0 0.0
    %740 = vmatpush1.msra.mxu0 0.0
    %741 = vmatprep.subr.mxu0 0.0
    %742 = vmatpush1.msra.mxu0 0.0
    %743 = vmatprep.subr.mxu0 0.0
    %744 = vmatpush1.msra.mxu0 0.0
    %745 = vmatprep.subr.mxu0 0.0
    %746 = vmatpush1.msra.mxu0 0.0
    %747 = vmatprep.subr.mxu0 0.0
    %748 = vmatpush1.msra.mxu0 0.0
    %749 = vmatprep.subr.mxu0 0.0
    %750 = vmatpush1.msra.mxu0 0.0
    %751 = vmatprep.subr.mxu0 0.0
    %752 = vmatpush1.msra.mxu0 0.0
    %753 = vmatprep.subr.mxu0 0.0
    %754 = vmatpush1.msra.mxu0 0.0
    %755 = vmatprep.subr.mxu0 0.0
    %756 = vmatpush1.msra.mxu0 0.0
    %757 = vmatprep.subr.mxu0 0.0
    %758 = vmatpush1.msra.mxu0 0.0
    %759 = vmatprep.subr.mxu0 0.0
    %760 = vmatpush1.msra.mxu0 0.0
    %761 = vmatprep.subr.mxu0 0.0
    %762 = vmatpush1.msra.mxu0 0.0
    %763 = vmatprep.subr.mxu0 0.0
    %764 = vmatpush1.msra.mxu0 0.0
    %765 = vmatprep.subr.mxu0 0.0
    %766 = vmatpush1.msra.mxu0 0.0
    %767 = vmatprep.subr.mxu0 0.0
    %768 = vmatpush1.msra.mxu0 0.0
    %769 = vmatprep.subr.mxu0 0.0
    %770 = vmatpush1.msra.mxu0 0.0
    %771 = vmatprep.subr.mxu0 0.0
    %772 = vmatpush1.msra.mxu0 0.0
    %773 = vmatprep.subr.mxu0 0.0
    %774 = vmatpush1.msra.mxu0 0.0
    %775 = vmatprep.subr.mxu0 0.0
    %776 = vmatpush1.msra.mxu0 0.0
    %777 = vmatprep.subr.mxu0 0.0
    %778 = vmatpush1.msra.mxu0 0.0
    %779 = vmatprep.subr.mxu0 0.0
    %780 = vmatpush1.msra.mxu0 0.0
    %781 = vmatprep.subr.mxu0 0.0
    %782 = vmatpush1.msra.mxu0 0.0
    %783 = vmatprep.subr.mxu0 0.0
    %784 = vmatpush1.msra.mxu0 0.0
    %785 = vmatprep.mubr.f32.mxu0 0.0
    %786 = vmatmul.mubr.f32.gmra.mrb[0].mxu0 %v719
    %v787 = vpop.f32.mrb[0].mxu0
    %v788 = vadd.f32 0.0, %v787
    %v789 = vpop.f32.mrb[0].mxu0
    %790 = vdwg.mxu0
    %v792 = vrot.slane %v788, 1
    %v795 = vadd.f32 %v717, %v788
    %v796 = vadd.f32 %v718, %v792
    %v797 = vxor.u32 %v795, 2147483648
    %v798 = vxor.u32 %v796, 2147483648
    %v799 = vmul.f32 %v797, 1.442695
    %v800 = vpow.pop %v799
    %v801 = vmul.f32 %v798, 1.442695
    %v802 = vpow.pop %v801
    %v803 = vadd.f32 %v800, 1.0
    %v804 = vadd.f32 %v802, 1.0
    %v805 = vrcp.pop %v803
    %v806 = vmul.f32 1.0, %v805
    %v807 = vrcp.pop %v804
    %v808 = vmul.f32 1.0, %v807
    %v809 = vtanh.pop %v795
    %v810 = vtanh.pop %v796
    %v811 = vmul.f32 %v806, %v694
    %v812 = vmul.f32 %v808, %v695
    %815 = vrot.lane.b32.xlu0 %v809, 32
    %v816 = vpop.permute.xlu0 %815
    %817 = vrot.lane.b32.xlu0 %v810, 32
    %v818 = vpop.permute.xlu0 %817
    %v821 = vmul.f32 %v806, %v816
    %v822 = vmul.f32 %v808, %v818
    %825 = vrot.lane.b32.xlu0 %v821, 32
    %v826 = vpop.permute.xlu0 %825
    %827 = vrot.lane.b32.xlu0 %v822, 32
    %v828 = vpop.permute.xlu0 %827
    %v831 = vadd.f32 %v811, %v826
    %v832 = vadd.f32 %v812, %v828
    %v833 = vtanh.pop %v831
    %v834 = vtanh.pop %v832
    %837 = vrot.lane.b32.xlu0 %v833, 32
    %v838 = vpop.permute.xlu0 %837
    %839 = vrot.lane.b32.xlu0 %v834, 32
    %v840 = vpop.permute.xlu0 %839
    %v843 = vmul.f32 %v806, %v838
    %v844 = vmul.f32 %v808, %v840
    %v847 = vrot.slane %v844, 7
    %v848 = vsel %vm299, %v847, %v843
    %849 = vrot.lane.b32.xlu0 %v848, 64
    %v850 = vpop.permute.xlu0 %849
    %s852 = scalar_lea.vmem [#allocation4], 8
    %853 = vst.msk [vmem:[%s852] sm:$0x3] %vm304, %v850
    %v854 = vld [vmem:[#allocation5 + $0x5] sm:$0x1]
    %v855 = vld [vmem:[#allocation5 + $0xd] sm:$0x1]
    %v856 = vsel %vm160, %v850, 0
    %858 = vmatprep.subr.mxu0 0.0
    %859 = vmatpush1.msra.mxu0 %v152
    %860 = vmatprep.subr.mxu0 0.0
    %861 = vmatpush1.msra.mxu0 %v153
    %862 = vmatprep.subr.mxu0 0.0
    %863 = vmatpush1.msra.mxu0 %v154
    %864 = vmatprep.subr.mxu0 0.0
    %865 = vmatpush1.msra.mxu0 %v155
    %866 = vmatprep.subr.mxu0 0.0
    %867 = vmatpush1.msra.mxu0 0.0
    %868 = vmatprep.subr.mxu0 0.0
    %869 = vmatpush1.msra.mxu0 0.0
    %870 = vmatprep.subr.mxu0 0.0
    %871 = vmatpush1.msra.mxu0 0.0
    %872 = vmatprep.subr.mxu0 0.0
    %873 = vmatpush1.msra.mxu0 0.0
    %874 = vmatprep.subr.mxu0 0.0
    %875 = vmatpush1.msra.mxu0 0.0
    %876 = vmatprep.subr.mxu0 0.0
    %877 = vmatpush1.msra.mxu0 0.0
    %878 = vmatprep.subr.mxu0 0.0
    %879 = vmatpush1.msra.mxu0 0.0
    %880 = vmatprep.subr.mxu0 0.0
    %881 = vmatpush1.msra.mxu0 0.0
    %882 = vmatprep.subr.mxu0 0.0
    %883 = vmatpush1.msra.mxu0 0.0
    %884 = vmatprep.subr.mxu0 0.0
    %885 = vmatpush1.msra.mxu0 0.0
    %886 = vmatprep.subr.mxu0 0.0
    %887 = vmatpush1.msra.mxu0 0.0
    %888 = vmatprep.subr.mxu0 0.0
    %889 = vmatpush1.msra.mxu0 0.0
    %890 = vmatprep.subr.mxu0 0.0
    %891 = vmatpush1.msra.mxu0 0.0
    %892 = vmatprep.subr.mxu0 0.0
    %893 = vmatpush1.msra.mxu0 0.0
    %894 = vmatprep.subr.mxu0 0.0
    %895 = vmatpush1.msra.mxu0 0.0
    %896 = vmatprep.subr.mxu0 0.0
    %897 = vmatpush1.msra.mxu0 0.0
    %898 = vmatprep.subr.mxu0 0.0
    %899 = vmatpush1.msra.mxu0 0.0
    %900 = vmatprep.subr.mxu0 0.0
    %901 = vmatpush1.msra.mxu0 0.0
    %902 = vmatprep.subr.mxu0 0.0
    %903 = vmatpush1.msra.mxu0 0.0
    %904 = vmatprep.subr.mxu0 0.0
    %905 = vmatpush1.msra.mxu0 0.0
    %906 = vmatprep.subr.mxu0 0.0
    %907 = vmatpush1.msra.mxu0 0.0
    %908 = vmatprep.subr.mxu0 0.0
    %909 = vmatpush1.msra.mxu0 0.0
    %910 = vmatprep.subr.mxu0 0.0
    %911 = vmatpush1.msra.mxu0 0.0
    %912 = vmatprep.subr.mxu0 0.0
    %913 = vmatpush1.msra.mxu0 0.0
    %914 = vmatprep.subr.mxu0 0.0
    %915 = vmatpush1.msra.mxu0 0.0
    %916 = vmatprep.subr.mxu0 0.0
    %917 = vmatpush1.msra.mxu0 0.0
    %918 = vmatprep.subr.mxu0 0.0
    %919 = vmatpush1.msra.mxu0 0.0
    %920 = vmatprep.subr.mxu0 0.0
    %921 = vmatpush1.msra.mxu0 0.0
    %922 = vmatprep.mubr.f32.mxu0 0.0
    %923 = vmatmul.mubr.f32.gmra.mrb[0].mxu0 %v856
    %v924 = vpop.f32.mrb[0].mxu0
    %v925 = vadd.f32 0.0, %v924
    %v926 = vpop.f32.mrb[0].mxu0
    %927 = vdwg.mxu0
    %v929 = vrot.slane %v925, 1
    %v932 = vadd.f32 %v854, %v925
    %v933 = vadd.f32 %v855, %v929
    %v934 = vxor.u32 %v932, 2147483648
    %v935 = vxor.u32 %v933, 2147483648
    %v936 = vmul.f32 %v934, 1.442695
    %v937 = vpow.pop %v936
    %v938 = vmul.f32 %v935, 1.442695
    %v939 = vpow.pop %v938
    %v940 = vadd.f32 %v937, 1.0
    %v941 = vadd.f32 %v939, 1.0
    %v942 = vrcp.pop %v940
    %v943 = vmul.f32 1.0, %v942
    %v944 = vrcp.pop %v941
    %v945 = vmul.f32 1.0, %v944
    %v946 = vtanh.pop %v932
    %v947 = vtanh.pop %v933
    %v948 = vmul.f32 %v943, %v831
    %v949 = vmul.f32 %v945, %v832
    %952 = vrot.lane.b32.xlu0 %v946, 32
    %v953 = vpop.permute.xlu0 %952
    %954 = vrot.lane.b32.xlu0 %v947, 32
    %v955 = vpop.permute.xlu0 %954
    %v958 = vmul.f32 %v943, %v953
    %v959 = vmul.f32 %v945, %v955
    %962 = vrot.lane.b32.xlu0 %v958, 32
    %v963 = vpop.permute.xlu0 %962
    %964 = vrot.lane.b32.xlu0 %v959, 32
    %v965 = vpop.permute.xlu0 %964
    %v968 = vadd.f32 %v948, %v963
    %v969 = vadd.f32 %v949, %v965
    %v970 = vtanh.pop %v968
    %v971 = vtanh.pop %v969
    %974 = vrot.lane.b32.xlu0 %v970, 32
    %v975 = vpop.permute.xlu0 %974
    %976 = vrot.lane.b32.xlu0 %v971, 32
    %v977 = vpop.permute.xlu0 %976
    %v980 = vmul.f32 %v943, %v975
    %v981 = vmul.f32 %v945, %v977
    %v984 = vrot.slane %v981, 7
    %v985 = vsel %vm299, %v984, %v980
    %986 = vrot.lane.b32.xlu0 %v985, 64
    %v987 = vpop.permute.xlu0 %986
    %s989 = scalar_lea.vmem [#allocation4], 10
    %990 = vst.msk [vmem:[%s989] sm:$0x3] %vm304, %v987
    %v991 = vld [vmem:[#allocation5 + $0x6] sm:$0x1]
    %v992 = vld [vmem:[#allocation5 + $0xe] sm:$0x1]
    %v993 = vsel %vm160, %v987, 0
    %995 = vmatprep.subr.mxu0 0.0
    %996 = vmatpush1.msra.mxu0 %v152
    %997 = vmatprep.subr.mxu0 0.0
    %998 = vmatpush1.msra.mxu0 %v153
    %999 = vmatprep.subr.mxu0 0.0
    %1000 = vmatpush1.msra.mxu0 %v154
    %1001 = vmatprep.subr.mxu0 0.0
    %1002 = vmatpush1.msra.mxu0 %v155
    %1003 = vmatprep.subr.mxu0 0.0
    %1004 = vmatpush1.msra.mxu0 0.0
    %1005 = vmatprep.subr.mxu0 0.0
    %1006 = vmatpush1.msra.mxu0 0.0
    %1007 = vmatprep.subr.mxu0 0.0
    %1008 = vmatpush1.msra.mxu0 0.0
    %1009 = vmatprep.subr.mxu0 0.0
    %1010 = vmatpush1.msra.mxu0 0.0
    %1011 = vmatprep.subr.mxu0 0.0
    %1012 = vmatpush1.msra.mxu0 0.0
    %1013 = vmatprep.subr.mxu0 0.0
    %1014 = vmatpush1.msra.mxu0 0.0
    %1015 = vmatprep.subr.mxu0 0.0
    %1016 = vmatpush1.msra.mxu0 0.0
    %1017 = vmatprep.subr.mxu0 0.0
    %1018 = vmatpush1.msra.mxu0 0.0
    %1019 = vmatprep.subr.mxu0 0.0
    %1020 = vmatpush1.msra.mxu0 0.0
    %1021 = vmatprep.subr.mxu0 0.0
    %1022 = vmatpush1.msra.mxu0 0.0
    %1023 = vmatprep.subr.mxu0 0.0
    %1024 = vmatpush1.msra.mxu0 0.0
    %1025 = vmatprep.subr.mxu0 0.0
    %1026 = vmatpush1.msra.mxu0 0.0
    %1027 = vmatprep.subr.mxu0 0.0
    %1028 = vmatpush1.msra.mxu0 0.0
    %1029 = vmatprep.subr.mxu0 0.0
    %1030 = vmatpush1.msra.mxu0 0.0
    %1031 = vmatprep.subr.mxu0 0.0
    %1032 = vmatpush1.msra.mxu0 0.0
    %1033 = vmatprep.subr.mxu0 0.0
    %1034 = vmatpush1.msra.mxu0 0.0
    %1035 = vmatprep.subr.mxu0 0.0
    %1036 = vmatpush1.msra.mxu0 0.0
    %1037 = vmatprep.subr.mxu0 0.0
    %1038 = vmatpush1.msra.mxu0 0.0
    %1039 = vmatprep.subr.mxu0 0.0
    %1040 = vmatpush1.msra.mxu0 0.0
    %1041 = vmatprep.subr.mxu0 0.0
    %1042 = vmatpush1.msra.mxu0 0.0
    %1043 = vmatprep.subr.mxu0 0.0
    %1044 = vmatpush1.msra.mxu0 0.0
    %1045 = vmatprep.subr.mxu0 0.0
    %1046 = vmatpush1.msra.mxu0 0.0
    %1047 = vmatprep.subr.mxu0 0.0
    %1048 = vmatpush1.msra.mxu0 0.0
    %1049 = vmatprep.subr.mxu0 0.0
    %1050 = vmatpush1.msra.mxu0 0.0
    %1051 = vmatprep.subr.mxu0 0.0
    %1052 = vmatpush1.msra.mxu0 0.0
    %1053 = vmatprep.subr.mxu0 0.0
    %1054 = vmatpush1.msra.mxu0 0.0
    %1055 = vmatprep.subr.mxu0 0.0
    %1056 = vmatpush1.msra.mxu0 0.0
    %1057 = vmatprep.subr.mxu0 0.0
    %1058 = vmatpush1.msra.mxu0 0.0
    %1059 = vmatprep.mubr.f32.mxu0 0.0
    %1060 = vmatmul.mubr.f32.gmra.mrb[0].mxu0 %v993
    %v1061 = vpop.f32.mrb[0].mxu0
    %v1062 = vadd.f32 0.0, %v1061
    %v1063 = vpop.f32.mrb[0].mxu0
    %1064 = vdwg.mxu0
    %v1066 = vrot.slane %v1062, 1
    %v1069 = vadd.f32 %v991, %v1062
    %v1070 = vadd.f32 %v992, %v1066
    %v1071 = vxor.u32 %v1069, 2147483648
    %v1072 = vxor.u32 %v1070, 2147483648
    %v1073 = vmul.f32 %v1071, 1.442695
    %v1074 = vpow.pop %v1073
    %v1075 = vmul.f32 %v1072, 1.442695
    %v1076 = vpow.pop %v1075
    %v1077 = vadd.f32 %v1074, 1.0
    %v1078 = vadd.f32 %v1076, 1.0
    %v1079 = vrcp.pop %v1077
    %v1080 = vmul.f32 1.0, %v1079
    %v1081 = vrcp.pop %v1078
    %v1082 = vmul.f32 1.0, %v1081
    %v1083 = vtanh.pop %v1069
    %v1084 = vtanh.pop %v1070
    %v1085 = vmul.f32 %v1080, %v968
    %v1086 = vmul.f32 %v1082, %v969
    %1089 = vrot.lane.b32.xlu0 %v1083, 32
    %v1090 = vpop.permute.xlu0 %1089
    %1091 = vrot.lane.b32.xlu0 %v1084, 32
    %v1092 = vpop.permute.xlu0 %1091
    %v1095 = vmul.f32 %v1080, %v1090
    %v1096 = vmul.f32 %v1082, %v1092
    %1099 = vrot.lane.b32.xlu0 %v1095, 32
    %v1100 = vpop.permute.xlu0 %1099
    %1101 = vrot.lane.b32.xlu0 %v1096, 32
    %v1102 = vpop.permute.xlu0 %1101
    %v1105 = vadd.f32 %v1085, %v1100
    %v1106 = vadd.f32 %v1086, %v1102
    %v1107 = vtanh.pop %v1105
    %v1108 = vtanh.pop %v1106
    %1111 = vrot.lane.b32.xlu0 %v1107, 32
    %v1112 = vpop.permute.xlu0 %1111
    %1113 = vrot.lane.b32.xlu0 %v1108, 32
    %v1114 = vpop.permute.xlu0 %1113
    %v1117 = vmul.f32 %v1080, %v1112
    %v1118 = vmul.f32 %v1082, %v1114
    %v1121 = vrot.slane %v1118, 7
    %v1122 = vsel %vm299, %v1121, %v1117
    %1123 = vrot.lane.b32.xlu0 %v1122, 64
    %v1124 = vpop.permute.xlu0 %1123
    %s1126 = scalar_lea.vmem [#allocation4], 12
    %1127 = vst.msk [vmem:[%s1126] sm:$0x3] %vm304, %v1124
    %v1128 = vld [vmem:[#allocation5 + $0x7] sm:$0x1]
    %v1129 = vld [vmem:[#allocation5 + $0xf] sm:$0x1]
    %v1130 = vsel %vm160, %v1124, 0
    %1132 = vmatprep.subr.mxu0 0.0
    %1133 = vmatpush1.msra.mxu0 %v152
    %1134 = vmatprep.subr.mxu0 0.0
    %1135 = vmatpush1.msra.mxu0 %v153
    %1136 = vmatprep.subr.mxu0 0.0
    %1137 = vmatpush1.msra.mxu0 %v154
    %1138 = vmatprep.subr.mxu0 0.0
    %1139 = vmatpush1.msra.mxu0 %v155
    %1140 = vmatprep.subr.mxu0 0.0
    %1141 = vmatpush1.msra.mxu0 0.0
    %1142 = vmatprep.subr.mxu0 0.0
    %1143 = vmatpush1.msra.mxu0 0.0
    %1144 = vmatprep.subr.mxu0 0.0
    %1145 = vmatpush1.msra.mxu0 0.0
    %1146 = vmatprep.subr.mxu0 0.0
    %1147 = vmatpush1.msra.mxu0 0.0
    %1148 = vmatprep.subr.mxu0 0.0
    %1149 = vmatpush1.msra.mxu0 0.0
    %1150 = vmatprep.subr.mxu0 0.0
    %1151 = vmatpush1.msra.mxu0 0.0
    %1152 = vmatprep.subr.mxu0 0.0
    %1153 = vmatpush1.msra.mxu0 0.0
    %1154 = vmatprep.subr.mxu0 0.0
    %1155 = vmatpush1.msra.mxu0 0.0
    %1156 = vmatprep.subr.mxu0 0.0
    %1157 = vmatpush1.msra.mxu0 0.0
    %1158 = vmatprep.subr.mxu0 0.0
    %1159 = vmatpush1.msra.mxu0 0.0
    %1160 = vmatprep.subr.mxu0 0.0
    %1161 = vmatpush1.msra.mxu0 0.0
    %1162 = vmatprep.subr.mxu0 0.0
    %1163 = vmatpush1.msra.mxu0 0.0
    %1164 = vmatprep.subr.mxu0 0.0
    %1165 = vmatpush1.msra.mxu0 0.0
    %1166 = vmatprep.subr.mxu0 0.0
    %1167 = vmatpush1.msra.mxu0 0.0
    %1168 = vmatprep.subr.mxu0 0.0
    %1169 = vmatpush1.msra.mxu0 0.0
    %1170 = vmatprep.subr.mxu0 0.0
    %1171 = vmatpush1.msra.mxu0 0.0
    %1172 = vmatprep.subr.mxu0 0.0
    %1173 = vmatpush1.msra.mxu0 0.0
    %1174 = vmatprep.subr.mxu0 0.0
    %1175 = vmatpush1.msra.mxu0 0.0
    %1176 = vmatprep.subr.mxu0 0.0
    %1177 = vmatpush1.msra.mxu0 0.0
    %1178 = vmatprep.subr.mxu0 0.0
    %1179 = vmatpush1.msra.mxu0 0.0
    %1180 = vmatprep.subr.mxu0 0.0
    %1181 = vmatpush1.msra.mxu0 0.0
    %1182 = vmatprep.subr.mxu0 0.0
    %1183 = vmatpush1.msra.mxu0 0.0
    %1184 = vmatprep.subr.mxu0 0.0
    %1185 = vmatpush1.msra.mxu0 0.0
    %1186 = vmatprep.subr.mxu0 0.0
    %1187 = vmatpush1.msra.mxu0 0.0
    %1188 = vmatprep.subr.mxu0 0.0
    %1189 = vmatpush1.msra.mxu0 0.0
    %1190 = vmatprep.subr.mxu0 0.0
    %1191 = vmatpush1.msra.mxu0 0.0
    %1192 = vmatprep.subr.mxu0 0.0
    %1193 = vmatpush1.msra.mxu0 0.0
    %1194 = vmatprep.subr.mxu0 0.0
    %1195 = vmatpush1.msra.mxu0 0.0
    %1196 = vmatprep.mubr.f32.mxu0 0.0
    %1197 = vmatmul.mubr.f32.gmra.mrb[0].mxu0 %v1130
    %v1198 = vpop.f32.mrb[0].mxu0
    %v1199 = vadd.f32 0.0, %v1198
    %v1200 = vpop.f32.mrb[0].mxu0
    %1201 = vdwg.mxu0
    %v1203 = vrot.slane %v1199, 1
    %v1206 = vadd.f32 %v1128, %v1199
    %v1207 = vadd.f32 %v1129, %v1203
    %v1208 = vxor.u32 %v1206, 2147483648
    %v1209 = vxor.u32 %v1207, 2147483648
    %v1210 = vmul.f32 %v1208, 1.442695
    %v1211 = vpow.pop %v1210
    %v1212 = vmul.f32 %v1209, 1.442695
    %v1213 = vpow.pop %v1212
    %v1214 = vadd.f32 %v1211, 1.0
    %v1215 = vadd.f32 %v1213, 1.0
    %v1216 = vrcp.pop %v1214
    %v1217 = vmul.f32 1.0, %v1216
    %v1218 = vrcp.pop %v1215
    %v1219 = vmul.f32 1.0, %v1218
    %v1220 = vtanh.pop %v1206
    %v1221 = vtanh.pop %v1207
    %v1222 = vmul.f32 %v1217, %v1105
    %v1223 = vmul.f32 %v1219, %v1106
    %1226 = vrot.lane.b32.xlu0 %v1220, 32
    %v1227 = vpop.permute.xlu0 %1226
    %1228 = vrot.lane.b32.xlu0 %v1221, 32
    %v1229 = vpop.permute.xlu0 %1228
    %v1232 = vmul.f32 %v1217, %v1227
    %v1233 = vmul.f32 %v1219, %v1229
    %1236 = vrot.lane.b32.xlu0 %v1232, 32
    %v1237 = vpop.permute.xlu0 %1236
    %1238 = vrot.lane.b32.xlu0 %v1233, 32
    %v1239 = vpop.permute.xlu0 %1238
    %v1242 = vadd.f32 %v1222, %v1237
    %v1243 = vadd.f32 %v1223, %v1239
    %v1244 = vtanh.pop %v1242
    %v1245 = vtanh.pop %v1243
    %1248 = vrot.lane.b32.xlu0 %v1244, 32
    %v1249 = vpop.permute.xlu0 %1248
    %1250 = vrot.lane.b32.xlu0 %v1245, 32
    %v1251 = vpop.permute.xlu0 %1250
    %v1254 = vmul.f32 %v1217, %v1249
    %v1255 = vmul.f32 %v1219, %v1251
    %v1258 = vrot.slane %v1255, 7
    %v1259 = vsel %vm299, %v1258, %v1254
    %1260 = vrot.lane.b32.xlu0 %v1259, 64
    %v1261 = vpop.permute.xlu0 %1260
    %s1263 = scalar_lea.vmem [#allocation4], 14
    %1264 = vst.msk [vmem:[%s1263] sm:$0x3] %vm304, %v1261
    %1265 = vst.msk [vmem:[#allocation2] sm:$0x3] %vm304, %v1261
    %v1268 = vrot.slane %v1243, 7
    %v1269 = vsel %vm299, %v1268, %v1242
    %1270 = vrot.lane.b32.xlu0 %v1269, 96
    %v1271 = vpop.permute.xlu0 %1270
    %1273 = vst.msk [vmem:[#allocation3] sm:$0x3] %vm304, %v1271
    %v1274 = vld [vmem:[#allocation4] sm:$0x3]
    %v1275 = vld [vmem:[#allocation4 + $0x2] sm:$0x3]
    %v1276 = vld [vmem:[#allocation4 + $0x4] sm:$0x3]
    %v1277 = vld [vmem:[#allocation4 + $0x6] sm:$0x3]
    %v1278 = vld [vmem:[#allocation4 + $0x8] sm:$0x3]
    %v1279 = vld [vmem:[#allocation4 + $0xa] sm:$0x3]
    %v1280 = vld [vmem:[#allocation4 + $0xc] sm:$0x3]
    %v1281 = vld [vmem:[#allocation4 + $0xe] sm:$0x3]
    %v1282 = vld [vmem:[%s4] sm:$0xff]
    %v1283 = vld [vmem:[%s4 + $0x8] sm:$0xff]
    %v1284 = vld [vmem:[%s4 + $0x10] sm:$0xff]
    %v1285 = vld [vmem:[%s4 + $0x18] sm:$0xff]
    %v1286 = vld [vmem:[%s5] sm:$0x1]
    %v1288 = vlaneseq
    %v1289 = vshrl.u32 %v1288, 7
    %v1290 = vsub.s32 0, %v1289
    %v1291 = vrot.slane %v1286, %v1290
    %v1301 = vcombine.low %v1274, %v1275
    %v1302 = vcombine.low %v1276, %v1277
    %v1304 = vunpack.c.l.s4 1983009808
    %v1305 = vunpack.c.0.s8 %v1304
    %v1306 = vlaneseq
    %v1307 = vshrl.u32 %v1306, 7
    %v1308 = vsub.s32 %v1305, %v1307
    %v1309 = vrot.slane %v1301, %v1308
    %v1311 = vunpack.c.l.s4 1983009808
    %v1312 = vunpack.c.0.s8 %v1311
    %v1313 = vlaneseq
    %v1314 = vshrl.u32 %v1313, 7
    %v1315 = vsub.s32 %v1312, %v1314
    %v1316 = vrot.slane %v1302, %v1315
    %v1317 = vcombine.low %v1309, %v1316
    %v1318 = vcombine.low %v1278, %v1279
    %v1319 = vcombine.low %v1280, %v1281
    %v1321 = vunpack.c.l.s4 1983009808
    %v1322 = vunpack.c.0.s8 %v1321
    %v1323 = vlaneseq
    %v1324 = vshrl.u32 %v1323, 7
    %v1325 = vsub.s32 %v1322, %v1324
    %v1326 = vrot.slane %v1318, %v1325
    %v1328 = vunpack.c.l.s4 1983009808
    %v1329 = vunpack.c.0.s8 %v1328
    %v1330 = vlaneseq
    %v1331 = vshrl.u32 %v1330, 7
    %v1332 = vsub.s32 %v1329, %v1331
    %v1333 = vrot.slane %v1319, %v1332
    %v1334 = vcombine.low %v1326, %v1333
    %v1335 = vsel %vm160, %v1317, 0
    %v1337 = vsel %vm160, %v1334, 0
    %1339 = vmatprep.subr.mxu0 0.0
    %1340 = vmatpush1.msra.mxu0 %v1282
    %1341 = vmatprep.subr.mxu0 0.0
    %1342 = vmatpush1.msra.mxu0 %v1283
    %1343 = vmatprep.subr.mxu0 0.0
    %1344 = vmatpush1.msra.mxu0 %v1284
    %1345 = vmatprep.subr.mxu0 0.0
    %1346 = vmatpush1.msra.mxu0 %v1285
    %1347 = vmatprep.subr.mxu0 0.0
    %1348 = vmatpush1.msra.mxu0 0.0
    %1349 = vmatprep.subr.mxu0 0.0
    %1350 = vmatpush1.msra.mxu0 0.0
    %1351 = vmatprep.subr.mxu0 0.0
    %1352 = vmatpush1.msra.mxu0 0.0
    %1353 = vmatprep.subr.mxu0 0.0
    %1354 = vmatpush1.msra.mxu0 0.0
    %1355 = vmatprep.subr.mxu0 0.0
    %1356 = vmatpush1.msra.mxu0 0.0
    %1357 = vmatprep.subr.mxu0 0.0
    %1358 = vmatpush1.msra.mxu0 0.0
    %1359 = vmatprep.subr.mxu0 0.0
    %1360 = vmatpush1.msra.mxu0 0.0
    %1361 = vmatprep.subr.mxu0 0.0
    %1362 = vmatpush1.msra.mxu0 0.0
    %1363 = vmatprep.subr.mxu0 0.0
    %1364 = vmatpush1.msra.mxu0 0.0
    %1365 = vmatprep.subr.mxu0 0.0
    %1366 = vmatpush1.msra.mxu0 0.0
    %1367 = vmatprep.subr.mxu0 0.0
    %1368 = vmatpush1.msra.mxu0 0.0
    %1369 = vmatprep.subr.mxu0 0.0
    %1370 = vmatpush1.msra.mxu0 0.0
    %1371 = vmatprep.subr.mxu0 0.0
    %1372 = vmatpush1.msra.mxu0 0.0
    %1373 = vmatprep.subr.mxu0 0.0
    %1374 = vmatpush1.msra.mxu0 0.0
    %1375 = vmatprep.subr.mxu0 0.0
    %1376 = vmatpush1.msra.mxu0 0.0
    %1377 = vmatprep.subr.mxu0 0.0
    %1378 = vmatpush1.msra.mxu0 0.0
    %1379 = vmatprep.subr.mxu0 0.0
    %1380 = vmatpush1.msra.mxu0 0.0
    %1381 = vmatprep.subr.mxu0 0.0
    %1382 = vmatpush1.msra.mxu0 0.0
    %1383 = vmatprep.subr.mxu0 0.0
    %1384 = vmatpush1.msra.mxu0 0.0
    %1385 = vmatprep.subr.mxu0 0.0
    %1386 = vmatpush1.msra.mxu0 0.0
    %1387 = vmatprep.subr.mxu0 0.0
    %1388 = vmatpush1.msra.mxu0 0.0
    %1389 = vmatprep.subr.mxu0 0.0
    %1390 = vmatpush1.msra.mxu0 0.0
    %1391 = vmatprep.subr.mxu0 0.0
    %1392 = vmatpush1.msra.mxu0 0.0
    %1393 = vmatprep.subr.mxu0 0.0
    %1394 = vmatpush1.msra.mxu0 0.0
    %1395 = vmatprep.subr.mxu0 0.0
    %1396 = vmatpush1.msra.mxu0 0.0
    %1397 = vmatprep.subr.mxu0 0.0
    %1398 = vmatpush1.msra.mxu0 0.0
    %1399 = vmatprep.subr.mxu0 0.0
    %1400 = vmatpush1.msra.mxu0 0.0
    %1401 = vmatprep.subr.mxu0 0.0
    %1402 = vmatpush1.msra.mxu0 0.0
    %1403 = vmatprep.mubr.f32.mxu0 0.0
    %1404 = vmatmul.mubr.f32.gmra.mrb[0].mxu0 %v1335
    %v1405 = vpop.f32.mrb[0].mxu0
    %v1406 = vadd.f32 %v1291, %v1405
    %v1407 = vpop.f32.mrb[0].mxu0
    %1408 = vmatprep.mubr.f32.mxu0 0.0
    %1409 = vmatmul.mubr.f32.gmra.mrb[0].mxu0 %v1337
    %v1410 = vpop.f32.mrb[0].mxu0
    %v1411 = vadd.f32 %v1291, %v1410
    %v1412 = vpop.f32.mrb[0].mxu0
    %1413 = vdwg.mxu0
    %vm1414 = vcmask 123904
    %1415 = vst.msk [vmem:[#allocation9] sm:$0x3] %vm1414, %v1406
    %1417 = vrot.lane.b32.xlu0 %v1406, 16
    %v1418 = vpop.permute.xlu0 %1417
    %vm1420 = vcmask 257154
    %1421 = vst.msk [vmem:[#allocation9 - $0x2] sm:$0xc] %vm1420, %v1418
    %1422 = vrot.lane.b32.xlu0 %v1406, 32
    %v1423 = vpop.permute.xlu0 %1422
    %vm1425 = vcmask 390404
    %1426 = vst.msk [vmem:[#allocation9 - $0x4] sm:$0x30] %vm1425, %v1423
    %1427 = vrot.lane.b32.xlu0 %v1406, 48
    %v1428 = vpop.permute.xlu0 %1427
    %vm1430 = vcmask 523654
    %1431 = vst.msk [vmem:[#allocation9 - $0x6] sm:$0xc0] %vm1430, %v1428
    %1433 = vrot.lane.b32.xlu0 %v1411, 64
    %v1434 = vpop.permute.xlu0 %1433
    %vm1436 = vcmask 648704
    %1437 = vst.msk [vmem:[#allocation9] sm:$0x3] %vm1436, %v1434
    %1438 = vrot.lane.b32.xlu0 %v1411, 80
    %v1439 = vpop.permute.xlu0 %1438
    %vm1441 = vcmask 781954
    %1442 = vst.msk [vmem:[#allocation9 - $0x2] sm:$0xc] %vm1441, %v1439
    %1443 = vrot.lane.b32.xlu0 %v1411, 96
    %v1444 = vpop.permute.xlu0 %1443
    %vm1446 = vcmask 915204
    %1447 = vst.msk [vmem:[#allocation9 - $0x4] sm:$0x30] %vm1446, %v1444
    %1448 = vrot.lane.b32.xlu0 %v1411, 112
    %v1449 = vpop.permute.xlu0 %1448
    %vm1451 = vcmask 1048454
    %1452 = vst.msk [vmem:[#allocation9 - $0x6] sm:$0xc0] %vm1451, %v1449
    // Predicated region
    $region42: #{tpu_custom_call.1} parent=1 // pred_check
      %p1453 = pneg %p48
    $region43: #{tpu_custom_call.1} parent=1 // pred_check_branch
      %1455 = sbr.rel (%p1453) target = $region45
    $region44: #{tpu_custom_call.1} parent=1 // pred_region
      %1456 = vst.msk [vmem:[#allocation10] sm:$0x3] %vm304, %v1261
      %1457 = vst.msk [vmem:[#allocation12] sm:$0x3] %vm304, %v1271
    $region45: #{tpu_custom_call.1} parent=1 // pred_fallthru
      _
    // Predicated region
    $region46: #{tpu_custom_call.1} parent=1 // pred_check
      _
    $region47: #{tpu_custom_call.1} parent=1 // pred_check_branch
      %1459 = sbr.rel (0) target = $region49
    $region48: #{tpu_custom_call.1} parent=1 // pred_region
      %s1461 = ssub.s32 32, 32
      %1462 = vsyncadd [#allocation8], %s1461
      %s1464 = sshll.u32 [#allocation9], 4
      %s1465 = int_to_ptr.vmem [resolvable:$true] %s1464
      %1467 = dma.vmem_to_hbm [thread:$0]  %s1465, 32, %s8, [#allocation8]
    $region49: #{tpu_custom_call.1} parent=1 // pred_fallthru
      _
    // Predicated region
    $region50: #{tpu_custom_call.1} parent=1 // pred_check
      _
    $region51: #{tpu_custom_call.1} parent=1 // pred_check_branch
      %1469 = sbr.rel (0) target = $region53
    $region52: #{tpu_custom_call.1} parent=1 // pred_region
      %s1471 = ssub.s32 32, 32
      %1472 = vsyncadd [#allocation11], %s1471
      %s1474 = sshll.u32 [#allocation10], 4
      %s1475 = int_to_ptr.vmem [resolvable:$true] %s1474
      %1477 = dma.vmem_to_hbm [thread:$0]  %s1475, 32, %s9, [#allocation11]
    $region53: #{tpu_custom_call.1} parent=1 // pred_fallthru
      _
    // Predicated region
    $region54: #{tpu_custom_call.1} parent=1 // pred_check
      _
    $region55: #{tpu_custom_call.1} parent=1 // pred_check_branch
      %1479 = sbr.rel (0) target = $region57
    $region56: #{tpu_custom_call.1} parent=1 // pred_region
      %s1481 = ssub.s32 32, 32
      %1482 = vsyncadd [#allocation11], %s1481
      %s1484 = sshll.u32 [#allocation12], 4
      %s1485 = int_to_ptr.vmem [resolvable:$true] %s1484
      %1487 = dma.vmem_to_hbm [thread:$0]  %s1485, 32, %s10, [#allocation11]
    $region57: #{tpu_custom_call.1} parent=1 // pred_fallthru
      _
    // Predicated region
    $region58: #{tpu_custom_call.1} parent=1 // pred_check
      _
    $region59: #{tpu_custom_call.1} parent=1 // pred_check_branch
      %1489 = sbr.rel (0) target = $region61
    $region60: #{tpu_custom_call.1} parent=1 // pred_region
      %1490 = dma.done [#allocation8], 32
    $region61: #{tpu_custom_call.1} parent=1 // pred_fallthru
      _
    // Predicated region
    $region62: #{tpu_custom_call.1} parent=1 // pred_check
      _
    $region63: #{tpu_custom_call.1} parent=1 // pred_check_branch
      %1492 = sbr.rel (0) target = $region65
    $region64: #{tpu_custom_call.1} parent=1 // pred_region
      %1493 = dma.done [#allocation11], 32
    $region65: #{tpu_custom_call.1} parent=1 // pred_fallthru
      _
    // Predicated region
    $region66: #{tpu_custom_call.1} parent=1 // pred_check
      _
    $region67: #{tpu_custom_call.1} parent=1 // pred_check_branch
      %1495 = sbr.rel (0) target = $region69
    $region68: #{tpu_custom_call.1} parent=1 // pred_region
      %1496 = dma.done [#allocation11], 32
    $region69: #{tpu_custom_call.1} parent=1 // pred_fallthru
      _
    %1497 = vsyncpa [#allocation7], 1
    %1498 = vsyncpa [#allocation8], 1
    %1499 = vsyncpa [#allocation11], 1

</llo_original>
